<compile_context>
chip_gen: v5e
topology: v5e:2x2
jax: 0.10.0
libtpu: 0.0.40
codegen_flags: <defaults>
</compile_context>

<pallas_src>
import numpy as np
import jax
import jax.numpy as jnp
from jax import lax
from jax.experimental import pallas as pl
from jax.experimental.pallas import tpu as pltpu

INPUT_SIZE = 2 * 6 * 64   # 768
HIDDEN_SIZE = 16
K_SCALE = 400.0


# ----------------------------------------------------------------------------
# Deterministic parameter construction (mirrors NNUE.__init__)
# ----------------------------------------------------------------------------
def _pc_value(sign, pc_idx):
    """Replicates the torch pc_value() helper: flattened (2*6*64,) vector."""
    vals = (5.0, 3.0, 3.0, 0.001, 9.0, 1.0)
    rows = []
    for m in sign:
        for i, pv in enumerate(vals):
            if i == pc_idx:
                rows.append(np.full(64, m * pv / 10.0, dtype=np.float64))
            else:
                rows.append(np.full(64, 0.0001, dtype=np.float64))
    return np.concatenate(rows)  # (768,)


def build_params():
    key = jax.random.PRNGKey(42)
    kw, kb = jax.random.split(key)

    # l1: nn.Linear(768, 16). Rows 0..11 / bias 0..11 are overwritten by __init__;
    # rows 12..15 keep their (here: deterministic uniform, kaiming-style bound) init.
    bound = 1.0 / np.sqrt(INPUT_SIZE)
    w1 = np.asarray(
        jax.random.uniform(kw, (HIDDEN_SIZE, INPUT_SIZE), minval=-bound, maxval=bound),
        dtype=np.float64,
    )
    b1 = np.asarray(
        jax.random.uniform(kb, (HIDDEN_SIZE,), minval=-bound, maxval=bound),
        dtype=np.float64,
    )
    for i in range(6):
        w1[i] = _pc_value((1.0, 0.0), i)
        w1[i + 6] = _pc_value((0.0, 1.0), i)
    b1[:12] = 0.001

    # out: nn.Linear(16, 1) -- fully overwritten in __init__.
    w2 = np.full((1, HIDDEN_SIZE), 0.0001, dtype=np.float64)
    w2[0, :6] = 1000.0
    w2[0, 6:12] = -1000.0
    b2 = np.full((1,), 0.0001, dtype=np.float64)

    return (
        jnp.asarray(w1, dtype=jnp.float32),
        jnp.asarray(b1, dtype=jnp.float32),
        jnp.asarray(w2, dtype=jnp.float32),
        jnp.asarray(b2, dtype=jnp.float32),
    )


# ----------------------------------------------------------------------------
# Pallas kernel: fused Linear -> CReLU -> Linear(pre-scaled by 1/k) -> sigmoid
# ----------------------------------------------------------------------------
def nnue_kernel(x_ref, w1t_ref, b1_ref, w2s_ref, b2k_ref, o_ref):
    # bf16 0/1 features -> f32 on the VPU, then (tb,768) x (768,16) on the MXU.
    x = x_ref[...].astype(jnp.float32)
    h = jnp.dot(x, w1t_ref[...], preferred_element_type=jnp.float32)   # (tb, 16)
    h = jnp.clip(h + b1_ref[...], 0.0, 1.0)                            # CReLU

    # Second layer (already scaled by 1/k): contract the hidden dim of BOTH operands
    # (q @ k^T pattern) so the logits come out as a lane-dense (1, tb) row.
    logit = lax.dot_general(
        w2s_ref[...], h,
        dimension_numbers=(((1,), (1,)), ((), ())),
        preferred_element_type=jnp.float32,
    )                                                                  # (1, tb)

    # b2/k comes from SMEM as a plain scalar; sigmoid on the EUP.
    o_ref[0] = jax.nn.sigmoid(logit + b2k_ref[0])


def nnue_forward(x, w1, b1, w2, b2, k, *, tb=512):
    """x: (B, 768) bf16 (or f32) 0/1 features.  Returns (B, 1) f32 probabilities."""
    B, F = x.shape
    assert F == INPUT_SIZE

    num_tiles = pl.cdiv(B, tb)
    b_pad = num_tiles * tb
    if b_pad != B:
        # Zero-pad the batch to a tile multiple; padded rows are sliced off below.
        x = jnp.pad(x, ((0, b_pad - B), (0, 0)))

    # Host-side parameter prep (tiny, one-off): transpose W1, fold 1/k into W2 and b2.
    w1t = w1.T.astype(jnp.float32)                                  # (768, 16)
    b1r = b1.reshape(1, HIDDEN_SIZE).astype(jnp.float32)            # (1, 16)
    w2s = (w2.reshape(1, HIDDEN_SIZE) / k).astype(jnp.float32)      # (1, 16) = W2 / k
    b2k = (b2.reshape(1) / k).astype(jnp.float32)                   # (1,)    = b2 / k

    out_tiles = pl.pallas_call(
        nnue_kernel,
        out_shape=jax.ShapeDtypeStruct((num_tiles, 1, tb), jnp.float32),
        grid_spec=pltpu.PrefetchScalarGridSpec(
            num_scalar_prefetch=0,
            grid=(num_tiles,),
            in_specs=[
                pl.BlockSpec((tb, INPUT_SIZE), lambda i: (i, 0)),            # x tile
                pl.BlockSpec((INPUT_SIZE, HIDDEN_SIZE), lambda i: (0, 0)),   # W1^T
                pl.BlockSpec((1, HIDDEN_SIZE), lambda i: (0, 0)),            # b1
                pl.BlockSpec((1, HIDDEN_SIZE), lambda i: (0, 0)),            # W2 / k
                pl.BlockSpec(memory_space=pltpu.MemorySpace.SMEM),           # b2 / k
            ],
            out_specs=pl.BlockSpec((1, 1, tb), lambda i: (i, 0, 0)),
        ),
        compiler_params=pltpu.CompilerParams(
            dimension_semantics=("parallel",),
        ),
    )(x, w1t, b1r, w2s, b2k)

    # (num_tiles, 1, tb) row-major == batch order; drop padding, view as (B, 1).
    return out_tiles.reshape(-1)[:B].reshape(B, 1)


def nnue_reference(x, w1, b1, w2, b2, k):
    h = jnp.clip(x @ w1.T + b1, 0.0, 1.0)
    logit = h @ w2.T + b2
    return jax.nn.sigmoid(logit / k)


if __name__ == "__main__":
    B = 1000   # deliberately NOT a multiple of tb: exercises the padded final tile
    TB = 512   # grid = cdiv(1000, 512) = 2 steps -> both v7x TensorCores get work

    key = jax.random.PRNGKey(0)
    # NNUE features are sparse 0/1 piece-square indicators -> exact in bf16.
    x = jax.random.bernoulli(key, p=0.05, shape=(B, INPUT_SIZE)).astype(jnp.bfloat16)

    w1, b1, w2, b2 = build_params()
    k = K_SCALE  # TODO(synk): reference has self.k = None; surfaced as required arg.

    out = nnue_forward(x, w1, b1, w2, b2, k, tb=TB)
    out = jax.block_until_ready(out)

    ref = nnue_reference(x.astype(jnp.float32), w1, b1, w2, b2, k)
    assert out.shape == (B, 1)
    np.testing.assert_allclose(np.asarray(out), np.asarray(ref), rtol=5e-5, atol=1e-5)

    print("KERNEL_OK")
</pallas_src>

<mosaic_0001>
module attributes {stable_mosaic.version = 11 : i64} {
  func.func @nnue_kernel(%arg0: i32, %arg1: memref<512x768xbf16, #tpu.memory_space<vmem>>, %arg2: memref<768x16xf32, #tpu.memory_space<vmem>>, %arg3: memref<1x16xf32, #tpu.memory_space<vmem>>, %arg4: memref<1x16xf32, #tpu.memory_space<vmem>>, %arg5: memref<1xf32, #tpu.memory_space<smem>>, %arg6: memref<1x1x512xf32, #tpu.memory_space<vmem>>) attributes {dimension_semantics = [#tpu.dimension_semantics<parallel>], iteration_bounds = array<i64: 2>, scalar_prefetch = 0 : i64, scratch_operands = 0 : i64, tpu.core_type = #tpu.core_type<tc>, window_params = [{transform_indices = @transform_0, window_bounds = array<i64: 512, 768>}, {pipeline_mode = #tpu.pipeline_mode<synchronous>, transform_indices = @transform_1, window_bounds = array<i64: 768, 16>}, {pipeline_mode = #tpu.pipeline_mode<synchronous>, transform_indices = @transform_2, window_bounds = array<i64: 1, 16>}, {pipeline_mode = #tpu.pipeline_mode<synchronous>, transform_indices = @transform_3, window_bounds = array<i64: 1, 16>}, {transform_indices = @transform_4, window_bounds = array<i64: 1>}, {transform_indices = @transform_5, window_bounds = array<i64: 1, 1, 512>}]} {
    %c0 = arith.constant 0 : index
    %c0_0 = arith.constant 0 : index
    %0 = vector.load %arg1[%c0, %c0_0] : memref<512x768xbf16, #tpu.memory_space<vmem>>, vector<512x768xbf16>
    %1 = arith.extf %0 : vector<512x768xbf16> to vector<512x768xf32>
    %c0_1 = arith.constant 0 : index
    %c0_2 = arith.constant 0 : index
    %2 = vector.load %arg2[%c0_1, %c0_2] : memref<768x16xf32, #tpu.memory_space<vmem>>, vector<768x16xf32>
    %cst = arith.constant dense<0.000000e+00> : vector<512x16xf32>
    %3 = tpu.matmul %1, %2, %cst {dimension_numbers = #tpu.dot_dimension_numbers<[1], [0], [0], [1], [0, 0, 1, 1], [], []>} : vector<512x768xf32>, vector<768x16xf32>, vector<512x16xf32> -> vector<512x16xf32>
    %c0_3 = arith.constant 0 : index
    %c0_4 = arith.constant 0 : index
    %4 = vector.load %arg3[%c0_3, %c0_4] : memref<1x16xf32, #tpu.memory_space<vmem>>, vector<1x16xf32>
    %5 = vector.broadcast %4 : vector<1x16xf32> to vector<512x16xf32>
    %6 = arith.addf %3, %5 : vector<512x16xf32>
    %cst_5 = arith.constant 0.000000e+00 : f32
    %cst_6 = arith.constant 1.000000e+00 : f32
    %7 = vector.broadcast %cst_5 : f32 to vector<512x16xf32>
    %8 = arith.maximumf %7, %6 : vector<512x16xf32>
    %9 = vector.broadcast %cst_6 : f32 to vector<512x16xf32>
    %10 = arith.minimumf %9, %8 : vector<512x16xf32>
    %c0_7 = arith.constant 0 : index
    %c0_8 = arith.constant 0 : index
    %11 = vector.load %arg4[%c0_7, %c0_8] : memref<1x16xf32, #tpu.memory_space<vmem>>, vector<1x16xf32>
    %cst_9 = arith.constant dense<0.000000e+00> : vector<1x512xf32>
    %12 = tpu.matmul %11, %10, %cst_9 {dimension_numbers = #tpu.dot_dimension_numbers<[1], [1], [0], [0], [0, 0, 1, 0], [], []>} : vector<1x16xf32>, vector<512x16xf32>, vector<1x512xf32> -> vector<1x512xf32>
    %c0_10 = arith.constant 0 : index
    %13 = memref.load %arg5[%c0_10] : memref<1xf32, #tpu.memory_space<smem>>
    %14 = vector.broadcast %13 : f32 to vector<1x512xf32>
    %15 = arith.addf %12, %14 : vector<1x512xf32>
    %16 = arith.negf %15 : vector<1x512xf32>
    %17 = math.exp %16 : vector<1x512xf32>
    %cst_11 = arith.constant 1.000000e+00 : f32
    %18 = vector.broadcast %cst_11 : f32 to vector<1x512xf32>
    %19 = arith.addf %18, %17 : vector<1x512xf32>
    %20 = arith.divf %18, %19 : vector<1x512xf32>
    %c0_12 = arith.constant 0 : index
    %c0_13 = arith.constant 0 : index
    %c0_14 = arith.constant 0 : index
    %21 = vector.load %arg6[%c0_12, %c0_13, %c0_14] : memref<1x1x512xf32, #tpu.memory_space<vmem>>, vector<1x1x512xf32>
    %22 = vector.shape_cast %21 : vector<1x1x512xf32> to vector<1x512xf32>
    %23 = vector.shape_cast %20 : vector<1x512xf32> to vector<1x1x512xf32>
    tpu.vector_store %arg6[%c0_12, %c0_13, %c0_14], %23 {strides = array<i32>} : memref<1x1x512xf32, #tpu.memory_space<vmem>>, vector<1x1x512xf32>,
    return
  }
  func.func @transform_0(%arg0: i32) -> (i32, i32) {
    %c0_i32 = arith.constant 0 : i32
    %c0_i32_0 = arith.constant 0 : i32
    return %arg0, %c0_i32 : i32, i32
  }
  func.func @transform_1(%arg0: i32) -> (i32, i32) {
    %c0_i32 = arith.constant 0 : i32
    %c0_i32_0 = arith.constant 0 : i32
    %c0_i32_1 = arith.constant 0 : i32
    return %c0_i32, %c0_i32_0 : i32, i32
  }
  func.func @transform_2(%arg0: i32) -> (i32, i32) {
    %c0_i32 = arith.constant 0 : i32
    %c0_i32_0 = arith.constant 0 : i32
    %c0_i32_1 = arith.constant 0 : i32
    return %c0_i32, %c0_i32_0 : i32, i32
  }
  func.func @transform_3(%arg0: i32) -> (i32, i32) {
    %c0_i32 = arith.constant 0 : i32
    %c0_i32_0 = arith.constant 0 : i32
    %c0_i32_1 = arith.constant 0 : i32
    return %c0_i32, %c0_i32_0 : i32, i32
  }
  func.func @transform_4(%arg0: i32) -> i32 {
    %c0_i32 = arith.constant 0 : i32
    %c0_i32_0 = arith.constant 0 : i32
    return %c0_i32 : i32
  }
  func.func @transform_5(%arg0: i32) -> (i32, i32, i32) {
    %c0_i32 = arith.constant 0 : i32
    %c0_i32_0 = arith.constant 0 : i32
    %c0_i32_1 = arith.constant 0 : i32
    return %arg0, %c0_i32, %c0_i32_0 : i32, i32, i32
  }
}

</mosaic_0001>

<llo_original>
// kernel: tpu_custom_call.1
$region0: #{tpu_custom_call.1}
  #allocation0 [shape = 'u32[]', space=smem, size = 0x4, offset = 0x4, fixed_abs, tag = 'smem constant byte address 0x4 - core index']
  #allocation1 [shape = 'u32[72,128]{1,0:T(1,128)}', space=vmem, size = 0x9000, scoped, tag = 'internal scratch']
  #allocation2 [shape = 'f32[1]{0:T(128)S(6)}', space=smem, size = 0x200, scoped, tag = 'scoped memory for tpu_custom_call.1']
  %s0 = inlined_call_operand.hbm [shape: bf16[1024,768], index: 0, kind: input, shape index: {}]
  %s1 = inlined_call_operand.vmem [shape: f32[768,16], index: 1, kind: input, shape index: {}]
  %s2 = inlined_call_operand.hbm [shape: f32[1,16], index: 2, kind: input, shape index: {}]
  %s3 = inlined_call_operand.hbm [shape: f32[1,16], index: 3, kind: input, shape index: {}]
  %s4 = inlined_call_operand.<no memory space> [shape: f32[1], index: 4, kind: input, shape index: {}]
  %s5 = inlined_call_operand.hbm [shape: f32[2,1,512], index: 5, kind: output, shape index: {}]
  %s6 = sld [smem:[#allocation0]]
  $region65: #{tpu_custom_call.1} parent=0
    _
  %s8 = ssub.s32 1, %s6
  %s9 = scalar_select 0, %s8, %s6
  %10 = sst [smem:[#allocation2]] %s4
  $region1: #{tpu_custom_call.1} parent=0
    #allocation3 [shape = 'u8[1572864]{0}', space=vmem, size = 0x180000, scoped, tag = 'input window, operand 0']
    #allocation4 [shape = 's32[2]{0}', space=sflag, size = 0x8, scoped, tag = 'scoped memory for tpu_custom_call.1']
    #allocation5 [shape = 's32[2]{0}', space=sflag, size = 0x8, scoped, tag = 'scoped memory for tpu_custom_call.1']
    #allocation6 [shape = 'u8[512]{0}', space=vmem, size = 0x400, scoped, tag = 'input window, operand 2, single buffered']
    #allocation7 [shape = 's32[1]{0}', space=sflag, size = 0x4, scoped, tag = 'scoped memory for tpu_custom_call.1']
    #allocation8 [shape = 'u8[512]{0}', space=vmem, size = 0x400, scoped, tag = 'input window, operand 3, single buffered']
    #allocation9 [shape = 'u8[4096]{0}', space=vmem, size = 0x1000, scoped, tag = 'output window, operand 0']
    %11 = vsyncpa [#allocation4], 0
    %s12 = scalar_lea.sflag [#allocation4], 1
    %13 = vsyncpa %s12, 0
    %14 = vsyncpa [#allocation7], 0
    %15 = vsyncpa [#allocation5], 0
    %s16 = scalar_lea.sflag [#allocation5], 1
    %17 = vsyncpa %s16, 0
    loop: start=0, step=1, limit=4
    $region2: #{tpu_custom_call.1} parent=1 // loop_pre_header
      _
    $region3: #{tpu_custom_call.1} parent=1 // loop_header
      %s19 = sphi 0, %s23
      %p20 = scmp.ge.s32.totalorder %s19, 4
      %s29 = sphi 0, %s31
      %s32 = sphi 0, %s29
      %s33 = sphi 0, %s32
      %s49 = sphi 0, %s33
      %s53 = sphi 0, %s53
      %s55 = sphi 0, %s53
      %s56 = sphi 0, %s55
      %s70 = sphi 0, %s56
      %s74 = sphi 0, %s74
      %s76 = sphi 0, %s74
      %s77 = sphi 0, %s76
      %s91 = sphi 0, %s77
      %s95 = sphi 0, %s95
      %s97 = sphi 0, %s95
      %s98 = sphi 0, %s97
      %s112 = sphi 0, %s98
      %s116 = sphi 0, %s116
      %s118 = sphi 0, %s116
      %s119 = sphi 0, %s118
      %s133 = sphi 0, %s119
      %s139 = sphi 0, %s141
      %s142 = sphi 0, %s139
      %s143 = sphi 0, %s142
      %s159 = sphi 0, %s143
    $region4: #{tpu_custom_call.1} parent=1 // loop_header_branch
      %22 = sbr.rel (%p20) target = $region8
    $region5: #{tpu_custom_call.1} parent=1 // loop_body
      %s24 = ssub.s32 %s19, 1
      %s25 = ssub.s32 %s19, 2
      %s26 = sadd.s32 %s19, 1
      %s27 = ssub.s32 %s19, %s26
      %p28 = scmp.eq.s32.totalorder %s27, 0
      %s30 = sadd.s32 %s29, 1
      %s31 = scalar_select %p28, %s29, %s30
      %p34 = pneg %p28
      %p35 = scmp.eq.s32.totalorder %s19, 1
      %p36 = por %p34, %p35
      %p37 = scmp.ne.s32.totalorder %s29, %s32
      %p38 = scmp.eq.s32.totalorder %s19, 0
      %p39 = por %p37, %p38
      %p40 = scmp.ne.s32.totalorder %s29, %s32
      %p41 = scmp.eq.s32.totalorder %s24, 1
      %p42 = por %p40, %p41
      %p43 = scmp.ne.s32.totalorder %s32, %s33
      %p44 = scmp.eq.s32.totalorder %s24, 0
      %p45 = por %p43, %p44
      %p46 = scmp.ne.s32.totalorder %s32, %s33
      %p47 = scmp.eq.s32.totalorder %s25, 1
      %p48 = por %p46, %p47
      %p50 = scmp.ne.s32.totalorder %s33, %s49
      %p51 = scmp.eq.s32.totalorder %s25, 0
      %p52 = por %p50, %p51
      %s54 = sadd.s32 %s53, 1
      %p57 = scmp.eq.s32.totalorder %s19, 1
      %p58 = scmp.ne.s32.totalorder %s53, %s55
      %p59 = scmp.eq.s32.totalorder %s19, 0
      %p60 = por %p58, %p59
      %p61 = scmp.ne.s32.totalorder %s53, %s55
      %p62 = scmp.eq.s32.totalorder %s24, 1
      %p63 = por %p61, %p62
      %p64 = scmp.ne.s32.totalorder %s55, %s56
      %p65 = scmp.eq.s32.totalorder %s24, 0
      %p66 = por %p64, %p65
      %p67 = scmp.ne.s32.totalorder %s55, %s56
      %p68 = scmp.eq.s32.totalorder %s25, 1
      %p69 = por %p67, %p68
      %p71 = scmp.ne.s32.totalorder %s56, %s70
      %p72 = scmp.eq.s32.totalorder %s25, 0
      %p73 = por %p71, %p72
      %s75 = sadd.s32 %s74, 1
      %p78 = scmp.eq.s32.totalorder %s19, 1
      %p79 = scmp.ne.s32.totalorder %s74, %s76
      %p80 = scmp.eq.s32.totalorder %s19, 0
      %p81 = por %p79, %p80
      %p82 = scmp.ne.s32.totalorder %s74, %s76
      %p83 = scmp.eq.s32.totalorder %s24, 1
      %p84 = por %p82, %p83
      %p85 = scmp.ne.s32.totalorder %s76, %s77
      %p86 = scmp.eq.s32.totalorder %s24, 0
      %p87 = por %p85, %p86
      %p88 = scmp.ne.s32.totalorder %s76, %s77
      %p89 = scmp.eq.s32.totalorder %s25, 1
      %p90 = por %p88, %p89
      %p92 = scmp.ne.s32.totalorder %s77, %s91
      %p93 = scmp.eq.s32.totalorder %s25, 0
      %p94 = por %p92, %p93
      %s96 = sadd.s32 %s95, 1
      %p99 = scmp.eq.s32.totalorder %s19, 1
      %p100 = scmp.ne.s32.totalorder %s95, %s97
      %p101 = scmp.eq.s32.totalorder %s19, 0
      %p102 = por %p100, %p101
      %p103 = scmp.ne.s32.totalorder %s95, %s97
      %p104 = scmp.eq.s32.totalorder %s24, 1
      %p105 = por %p103, %p104
      %p106 = scmp.ne.s32.totalorder %s97, %s98
      %p107 = scmp.eq.s32.totalorder %s24, 0
      %p108 = por %p106, %p107
      %p109 = scmp.ne.s32.totalorder %s97, %s98
      %p110 = scmp.eq.s32.totalorder %s25, 1
      %p111 = por %p109, %p110
      %p113 = scmp.ne.s32.totalorder %s98, %s112
      %p114 = scmp.eq.s32.totalorder %s25, 0
      %p115 = por %p113, %p114
      %s117 = sadd.s32 %s116, 1
      %p120 = scmp.eq.s32.totalorder %s19, 1
      %p121 = scmp.ne.s32.totalorder %s116, %s118
      %p122 = scmp.eq.s32.totalorder %s19, 0
      %p123 = por %p121, %p122
      %p124 = scmp.ne.s32.totalorder %s116, %s118
      %p125 = scmp.eq.s32.totalorder %s24, 1
      %p126 = por %p124, %p125
      %p127 = scmp.ne.s32.totalorder %s118, %s119
      %p128 = scmp.eq.s32.totalorder %s24, 0
      %p129 = por %p127, %p128
      %p130 = scmp.ne.s32.totalorder %s118, %s119
      %p131 = scmp.eq.s32.totalorder %s25, 1
      %p132 = por %p130, %p131
      %p134 = scmp.ne.s32.totalorder %s119, %s133
      %p135 = scmp.eq.s32.totalorder %s25, 0
      %p136 = por %p134, %p135
      %s137 = ssub.s32 %s19, %s26
      %p138 = scmp.eq.s32.totalorder %s137, 0
      %s140 = sadd.s32 %s139, 1
      %s141 = scalar_select %p138, %s139, %s140
      %p144 = pneg %p138
      %p145 = scmp.eq.s32.totalorder %s19, 1
      %p146 = por %p144, %p145
      %p147 = scmp.ne.s32.totalorder %s139, %s142
      %p148 = scmp.eq.s32.totalorder %s19, 0
      %p149 = por %p147, %p148
      %p150 = scmp.ne.s32.totalorder %s139, %s142
      %p151 = scmp.eq.s32.totalorder %s24, 1
      %p152 = por %p150, %p151
      %p153 = scmp.ne.s32.totalorder %s142, %s143
      %p154 = scmp.eq.s32.totalorder %s24, 0
      %p155 = por %p153, %p154
      %p156 = scmp.ne.s32.totalorder %s142, %s143
      %p157 = scmp.eq.s32.totalorder %s25, 1
      %p158 = por %p156, %p157
      %p160 = scmp.ne.s32.totalorder %s143, %s159
      %p161 = scmp.eq.s32.totalorder %s25, 0
      %p162 = por %p160, %p161
      %p163 = scmp.le.s32.totalorder 1, %s19
      %p164 = scmp.lt.s32.totalorder %s19, 3
      %p165 = pnand %p163, %p164
      %p166 = pneg %p165
      // Predicated region
      $region9: #{tpu_custom_call.1} parent=5 // pred_check
        _
      $region10: #{tpu_custom_call.1} parent=5 // pred_check_branch
        %168 = sbr.rel (%p165) target = $region12
      $region11: #{tpu_custom_call.1} parent=5 // pred_region
        %s169 = ssub.s32 %s19, 1
        // Predicated region
        $region13: #{tpu_custom_call.1} parent=11 // pred_check
          %p170 = pneg %p66
        $region14: #{tpu_custom_call.1} parent=11 // pred_check_branch
          %172 = sbr.rel (%p170) target = $region16
        $region15: #{tpu_custom_call.1} parent=11 // pred_region
          _
        $region16: #{tpu_custom_call.1} parent=11 // pred_fallthru
          _
        // Predicated region
        $region17: #{tpu_custom_call.1} parent=11 // pred_check
          %p173 = pneg %p87
        $region18: #{tpu_custom_call.1} parent=11 // pred_check_branch
          %175 = sbr.rel (%p173) target = $region20
        $region19: #{tpu_custom_call.1} parent=11 // pred_region
          %177 = vsyncadd [#allocation7], 0
          %s179 = sshll.u32 %s2, 4
          %s180 = int_to_ptr.hbm [resolvable:$true] %s179
          %s181 = sshll.u32 [#allocation6], 4
          %s182 = int_to_ptr.vmem [resolvable:$true] %s181
          %184 = dma.hbm_to_vmem [thread:$0]  %s180, 16, %s182, [#allocation7]
        $region20: #{tpu_custom_call.1} parent=11 // pred_fallthru
          _
        // Predicated region
        $region21: #{tpu_custom_call.1} parent=11 // pred_check
          %p185 = pneg %p108
        $region22: #{tpu_custom_call.1} parent=11 // pred_check_branch
          %187 = sbr.rel (%p185) target = $region24
        $region23: #{tpu_custom_call.1} parent=11 // pred_region
          %189 = vsyncadd [#allocation7], 0
          %s191 = sshll.u32 %s3, 4
          %s192 = int_to_ptr.hbm [resolvable:$true] %s191
          %s193 = sshll.u32 [#allocation8], 4
          %s194 = int_to_ptr.vmem [resolvable:$true] %s193
          %196 = dma.hbm_to_vmem [thread:$0]  %s192, 16, %s194, [#allocation7]
        $region24: #{tpu_custom_call.1} parent=11 // pred_fallthru
          _
        // Predicated region
        $region25: #{tpu_custom_call.1} parent=11 // pred_check
          %p197 = pneg %p129
        $region26: #{tpu_custom_call.1} parent=11 // pred_check_branch
          %199 = sbr.rel (%p197) target = $region28
        $region27: #{tpu_custom_call.1} parent=11 // pred_region
          _
        $region28: #{tpu_custom_call.1} parent=11 // pred_fallthru
          _
      $region12: #{tpu_custom_call.1} parent=5 // pred_fallthru
        _
      %p200 = scmp.lt.s32.totalorder %s19, 2
      // Predicated region
      $region29: #{tpu_custom_call.1} parent=5 // pred_check
        %p201 = pneg %p200
      $region30: #{tpu_custom_call.1} parent=5 // pred_check_branch
        %203 = sbr.rel (%p201) target = $region32
      $region31: #{tpu_custom_call.1} parent=5 // pred_region
        // Predicated region
        $region33: #{tpu_custom_call.1} parent=31 // pred_check
          %p204 = pneg %p39
        $region34: #{tpu_custom_call.1} parent=31 // pred_check_branch
          %206 = sbr.rel (%p204) target = $region36
        $region35: #{tpu_custom_call.1} parent=31 // pred_region
          %s207 = sand.u32 %s29, 1
          %s208 = scalar_lea.sflag [#allocation4], %s207
          %s209 = sand.u32 %s29, 1
          %s210 = smul.addr %s209, 1536
          %s211 = scalar_lea.vmem [#allocation3], %s210
          %s212 = smul.u32 64, %s19
          %214 = vsyncadd %s208, 0
          %s215 = smul.addr %s212, 6
          %s216 = smul.addr %s215, 4
          %s217 = scalar_lea.hbm %s0, %s216
          %s218 = sshll.u32 %s217, 4
          %s219 = int_to_ptr.hbm [resolvable:$true] %s218
          %s220 = sshll.u32 %s211, 4
          %s221 = int_to_ptr.vmem [resolvable:$true] %s220
          %226 = dma.hbm_to_vmem [thread:$0]  %s219, 24576, %s221, %s208, 384, 384, 24
        $region36: #{tpu_custom_call.1} parent=31 // pred_fallthru
          _
      $region32: #{tpu_custom_call.1} parent=5 // pred_fallthru
        _
      %p227 = scmp.le.s32.totalorder 1, %s19
      %p228 = scmp.lt.s32.totalorder %s19, 3
      %p229 = pnand %p227, %p228
      %p230 = pneg %p229
      // Predicated region
      $region37: #{tpu_custom_call.1} parent=5 // pred_check
        _
      $region38: #{tpu_custom_call.1} parent=5 // pred_check_branch
        %232 = sbr.rel (%p229) target = $region40
      $region39: #{tpu_custom_call.1} parent=5 // pred_region
        %s233 = ssub.s32 %s19, 1
        %s234 = sand.u32 %s32, 1
        %s235 = scalar_lea.sflag [#allocation4], %s234
        %s236 = sand.u32 %s32, 1
        %s237 = smul.addr %s236, 1536
        %s238 = scalar_lea.vmem [#allocation3], %s237
        // Predicated region
        $region41: #{tpu_custom_call.1} parent=39 // pred_check
          %p239 = pneg %p45
        $region42: #{tpu_custom_call.1} parent=39 // pred_check_branch
          %241 = sbr.rel (%p239) target = $region44
        $region43: #{tpu_custom_call.1} parent=39 // pred_region
          %243 = dma.done %s235, 24576
        $region44: #{tpu_custom_call.1} parent=39 // pred_fallthru
          _
        // Predicated region
        $region45: #{tpu_custom_call.1} parent=39 // pred_check
          %p244 = pneg %p87
        $region46: #{tpu_custom_call.1} parent=39 // pred_check_branch
          %246 = sbr.rel (%p244) target = $region48
        $region47: #{tpu_custom_call.1} parent=39 // pred_region
          %248 = dma.done [#allocation7], 16
        $region48: #{tpu_custom_call.1} parent=39 // pred_fallthru
          _
        // Predicated region
        $region49: #{tpu_custom_call.1} parent=39 // pred_check
          %p249 = pneg %p108
        $region50: #{tpu_custom_call.1} parent=39 // pred_check_branch
          %251 = sbr.rel (%p249) target = $region52
        $region51: #{tpu_custom_call.1} parent=39 // pred_region
          %253 = dma.done [#allocation7], 16
        $region52: #{tpu_custom_call.1} parent=39 // pred_fallthru
          _
        %s254 = sand.u32 %s32, 1
        %s255 = scalar_lea.sflag [#allocation4], %s254
        %s256 = sand.u32 %s32, 1
        %s257 = smul.addr %s256, 1536
        %s258 = scalar_lea.vmem [#allocation3], %s257
        %p259 = pneg %p45
        %p260 = pneg %p42
        %p261 = pneg %p66
        %p262 = pneg %p63
        %p263 = pneg %p87
        %p264 = pneg %p84
        %p265 = pneg %p108
        %p266 = pneg %p105
        %p267 = pneg %p129
        %p268 = pneg %p126
        %p269 = pneg %p155
        %p270 = pneg %p152
        %s271 = sand.u32 %s142, 1
        %s272 = scalar_lea.sflag [#allocation5], %s271
        %s273 = sand.u32 %s142, 1
        %s274 = smul.addr %s273, 4
        %s275 = scalar_lea.vmem [#allocation9], %s274
        %s276 = smul.u32 64, %s24
        %v277 = vld [vmem:[%s238] sm:$0xff]
        %v278 = vld [vmem:[%s238 + $0x8] sm:$0xff]
        %v279 = vld [vmem:[%s238 + $0x10] sm:$0xff]
        %v280 = vld [vmem:[%s238 + $0x18] sm:$0xff]
        %v281 = vld [vmem:[%s238 + $0x20] sm:$0xff]
        %v282 = vld [vmem:[%s238 + $0x28] sm:$0xff]
        %v283 = vld [vmem:[%s238 + $0x30] sm:$0xff]
        %v284 = vld [vmem:[%s238 + $0x38] sm:$0xff]
        %v285 = vld [vmem:[%s238 + $0x40] sm:$0xff]
        %v286 = vld [vmem:[%s238 + $0x48] sm:$0xff]
        %v287 = vld [vmem:[%s238 + $0x50] sm:$0xff]
        %v288 = vld [vmem:[%s238 + $0x58] sm:$0xff]
        %v289 = vld [vmem:[%s238 + $0x60] sm:$0xff]
        %v290 = vld [vmem:[%s238 + $0x68] sm:$0xff]
        %v291 = vld [vmem:[%s238 + $0x70] sm:$0xff]
        %v292 = vld [vmem:[%s238 + $0x78] sm:$0xff]
        %v293 = vld [vmem:[%s238 + $0x80] sm:$0xff]
        %v294 = vld [vmem:[%s238 + $0x88] sm:$0xff]
        %v295 = vld [vmem:[%s238 + $0x90] sm:$0xff]
        %v296 = vld [vmem:[%s238 + $0x98] sm:$0xff]
        %v297 = vld [vmem:[%s238 + $0xa0] sm:$0xff]
        %v298 = vld [vmem:[%s238 + $0xa8] sm:$0xff]
        %v299 = vld [vmem:[%s238 + $0xb0] sm:$0xff]
        %v300 = vld [vmem:[%s238 + $0xb8] sm:$0xff]
        %v301 = vld [vmem:[%s238 + $0xc0] sm:$0xff]
        %v302 = vld [vmem:[%s238 + $0xc8] sm:$0xff]
        %v303 = vld [vmem:[%s238 + $0xd0] sm:$0xff]
        %v304 = vld [vmem:[%s238 + $0xd8] sm:$0xff]
        %v305 = vld [vmem:[%s238 + $0xe0] sm:$0xff]
        %v306 = vld [vmem:[%s238 + $0xe8] sm:$0xff]
        %v307 = vld [vmem:[%s238 + $0xf0] sm:$0xff]
        %v308 = vld [vmem:[%s238 + $0xf8] sm:$0xff]
        %v309 = vld [vmem:[%s238 + $0x100] sm:$0xff]
        %v310 = vld [vmem:[%s238 + $0x108] sm:$0xff]
        %v311 = vld [vmem:[%s238 + $0x110] sm:$0xff]
        %v312 = vld [vmem:[%s238 + $0x118] sm:$0xff]
        %v313 = vld [vmem:[%s238 + $0x120] sm:$0xff]
        %v314 = vld [vmem:[%s238 + $0x128] sm:$0xff]
        %v315 = vld [vmem:[%s238 + $0x130] sm:$0xff]
        %v316 = vld [vmem:[%s238 + $0x138] sm:$0xff]
        %v317 = vld [vmem:[%s238 + $0x140] sm:$0xff]
        %v318 = vld [vmem:[%s238 + $0x148] sm:$0xff]
        %v319 = vld [vmem:[%s238 + $0x150] sm:$0xff]
        %v320 = vld [vmem:[%s238 + $0x158] sm:$0xff]
        %v321 = vld [vmem:[%s238 + $0x160] sm:$0xff]
        %v322 = vld [vmem:[%s238 + $0x168] sm:$0xff]
        %v323 = vld [vmem:[%s238 + $0x170] sm:$0xff]
        %v324 = vld [vmem:[%s238 + $0x178] sm:$0xff]
        %v325 = vld [vmem:[%s238 + $0x180] sm:$0xff]
        %v326 = vld [vmem:[%s238 + $0x188] sm:$0xff]
        %v327 = vld [vmem:[%s238 + $0x190] sm:$0xff]
        %v328 = vld [vmem:[%s238 + $0x198] sm:$0xff]
        %v329 = vld [vmem:[%s238 + $0x1a0] sm:$0xff]
        %v330 = vld [vmem:[%s238 + $0x1a8] sm:$0xff]
        %v331 = vld [vmem:[%s238 + $0x1b0] sm:$0xff]
        %v332 = vld [vmem:[%s238 + $0x1b8] sm:$0xff]
        %v333 = vld [vmem:[%s238 + $0x1c0] sm:$0xff]
        %v334 = vld [vmem:[%s238 + $0x1c8] sm:$0xff]
        %v335 = vld [vmem:[%s238 + $0x1d0] sm:$0xff]
        %v336 = vld [vmem:[%s238 + $0x1d8] sm:$0xff]
        %v337 = vld [vmem:[%s238 + $0x1e0] sm:$0xff]
        %v338 = vld [vmem:[%s238 + $0x1e8] sm:$0xff]
        %v339 = vld [vmem:[%s238 + $0x1f0] sm:$0xff]
        %v340 = vld [vmem:[%s238 + $0x1f8] sm:$0xff]
        %v341 = vld [vmem:[%s238 + $0x200] sm:$0xff]
        %v342 = vld [vmem:[%s238 + $0x208] sm:$0xff]
        %v343 = vld [vmem:[%s238 + $0x210] sm:$0xff]
        %v344 = vld [vmem:[%s238 + $0x218] sm:$0xff]
        %v345 = vld [vmem:[%s238 + $0x220] sm:$0xff]
        %v346 = vld [vmem:[%s238 + $0x228] sm:$0xff]
        %v347 = vld [vmem:[%s238 + $0x230] sm:$0xff]
        %v348 = vld [vmem:[%s238 + $0x238] sm:$0xff]
        %v349 = vld [vmem:[%s238 + $0x240] sm:$0xff]
        %v350 = vld [vmem:[%s238 + $0x248] sm:$0xff]
        %v351 = vld [vmem:[%s238 + $0x250] sm:$0xff]
        %v352 = vld [vmem:[%s238 + $0x258] sm:$0xff]
        %v353 = vld [vmem:[%s238 + $0x260] sm:$0xff]
        %v354 = vld [vmem:[%s238 + $0x268] sm:$0xff]
        %v355 = vld [vmem:[%s238 + $0x270] sm:$0xff]
        %v356 = vld [vmem:[%s238 + $0x278] sm:$0xff]
        %v357 = vld [vmem:[%s238 + $0x280] sm:$0xff]
        %v358 = vld [vmem:[%s238 + $0x288] sm:$0xff]
        %v359 = vld [vmem:[%s238 + $0x290] sm:$0xff]
        %v360 = vld [vmem:[%s238 + $0x298] sm:$0xff]
        %v361 = vld [vmem:[%s238 + $0x2a0] sm:$0xff]
        %v362 = vld [vmem:[%s238 + $0x2a8] sm:$0xff]
        %v363 = vld [vmem:[%s238 + $0x2b0] sm:$0xff]
        %v364 = vld [vmem:[%s238 + $0x2b8] sm:$0xff]
        %v365 = vld [vmem:[%s238 + $0x2c0] sm:$0xff]
        %v366 = vld [vmem:[%s238 + $0x2c8] sm:$0xff]
        %v367 = vld [vmem:[%s238 + $0x2d0] sm:$0xff]
        %v368 = vld [vmem:[%s238 + $0x2d8] sm:$0xff]
        %v369 = vld [vmem:[%s238 + $0x2e0] sm:$0xff]
        %v370 = vld [vmem:[%s238 + $0x2e8] sm:$0xff]
        %v371 = vld [vmem:[%s238 + $0x2f0] sm:$0xff]
        %v372 = vld [vmem:[%s238 + $0x2f8] sm:$0xff]
        %v373 = vld [vmem:[%s238 + $0x300] sm:$0xff]
        %v374 = vld [vmem:[%s238 + $0x308] sm:$0xff]
        %v375 = vld [vmem:[%s238 + $0x310] sm:$0xff]
        %v376 = vld [vmem:[%s238 + $0x318] sm:$0xff]
        %v377 = vld [vmem:[%s238 + $0x320] sm:$0xff]
        %v378 = vld [vmem:[%s238 + $0x328] sm:$0xff]
        %v379 = vld [vmem:[%s238 + $0x330] sm:$0xff]
        %v380 = vld [vmem:[%s238 + $0x338] sm:$0xff]
        %v381 = vld [vmem:[%s238 + $0x340] sm:$0xff]
        %v382 = vld [vmem:[%s238 + $0x348] sm:$0xff]
        %v383 = vld [vmem:[%s238 + $0x350] sm:$0xff]
        %v384 = vld [vmem:[%s238 + $0x358] sm:$0xff]
        %v385 = vld [vmem:[%s238 + $0x360] sm:$0xff]
        %v386 = vld [vmem:[%s238 + $0x368] sm:$0xff]
        %v387 = vld [vmem:[%s238 + $0x370] sm:$0xff]
        %v388 = vld [vmem:[%s238 + $0x378] sm:$0xff]
        %v389 = vld [vmem:[%s238 + $0x380] sm:$0xff]
        %v390 = vld [vmem:[%s238 + $0x388] sm:$0xff]
        %v391 = vld [vmem:[%s238 + $0x390] sm:$0xff]
        %v392 = vld [vmem:[%s238 + $0x398] sm:$0xff]
        %v393 = vld [vmem:[%s238 + $0x3a0] sm:$0xff]
        %v394 = vld [vmem:[%s238 + $0x3a8] sm:$0xff]
        %v395 = vld [vmem:[%s238 + $0x3b0] sm:$0xff]
        %v396 = vld [vmem:[%s238 + $0x3b8] sm:$0xff]
        %v397 = vld [vmem:[%s238 + $0x3c0] sm:$0xff]
        %v398 = vld [vmem:[%s238 + $0x3c8] sm:$0xff]
        %v399 = vld [vmem:[%s238 + $0x3d0] sm:$0xff]
        %v400 = vld [vmem:[%s238 + $0x3d8] sm:$0xff]
        %v401 = vld [vmem:[%s238 + $0x3e0] sm:$0xff]
        %v402 = vld [vmem:[%s238 + $0x3e8] sm:$0xff]
        %v403 = vld [vmem:[%s238 + $0x3f0] sm:$0xff]
        %v404 = vld [vmem:[%s238 + $0x3f8] sm:$0xff]
        %v405 = vld [vmem:[%s238 + $0x400] sm:$0xff]
        %v406 = vld [vmem:[%s238 + $0x408] sm:$0xff]
        %v407 = vld [vmem:[%s238 + $0x410] sm:$0xff]
        %v408 = vld [vmem:[%s238 + $0x418] sm:$0xff]
        %v409 = vld [vmem:[%s238 + $0x420] sm:$0xff]
        %v410 = vld [vmem:[%s238 + $0x428] sm:$0xff]
        %v411 = vld [vmem:[%s238 + $0x430] sm:$0xff]
        %v412 = vld [vmem:[%s238 + $0x438] sm:$0xff]
        %v413 = vld [vmem:[%s238 + $0x440] sm:$0xff]
        %v414 = vld [vmem:[%s238 + $0x448] sm:$0xff]
        %v415 = vld [vmem:[%s238 + $0x450] sm:$0xff]
        %v416 = vld [vmem:[%s238 + $0x458] sm:$0xff]
        %v417 = vld [vmem:[%s238 + $0x460] sm:$0xff]
        %v418 = vld [vmem:[%s238 + $0x468] sm:$0xff]
        %v419 = vld [vmem:[%s238 + $0x470] sm:$0xff]
        %v420 = vld [vmem:[%s238 + $0x478] sm:$0xff]
        %v421 = vld [vmem:[%s238 + $0x480] sm:$0xff]
        %v422 = vld [vmem:[%s238 + $0x488] sm:$0xff]
        %v423 = vld [vmem:[%s238 + $0x490] sm:$0xff]
        %v424 = vld [vmem:[%s238 + $0x498] sm:$0xff]
        %v425 = vld [vmem:[%s238 + $0x4a0] sm:$0xff]
        %v426 = vld [vmem:[%s238 + $0x4a8] sm:$0xff]
        %v427 = vld [vmem:[%s238 + $0x4b0] sm:$0xff]
        %v428 = vld [vmem:[%s238 + $0x4b8] sm:$0xff]
        %v429 = vld [vmem:[%s238 + $0x4c0] sm:$0xff]
        %v430 = vld [vmem:[%s238 + $0x4c8] sm:$0xff]
        %v431 = vld [vmem:[%s238 + $0x4d0] sm:$0xff]
        %v432 = vld [vmem:[%s238 + $0x4d8] sm:$0xff]
        %v433 = vld [vmem:[%s238 + $0x4e0] sm:$0xff]
        %v434 = vld [vmem:[%s238 + $0x4e8] sm:$0xff]
        %v435 = vld [vmem:[%s238 + $0x4f0] sm:$0xff]
        %v436 = vld [vmem:[%s238 + $0x4f8] sm:$0xff]
        %v437 = vld [vmem:[%s238 + $0x500] sm:$0xff]
        %v438 = vld [vmem:[%s238 + $0x508] sm:$0xff]
        %v439 = vld [vmem:[%s238 + $0x510] sm:$0xff]
        %v440 = vld [vmem:[%s238 + $0x518] sm:$0xff]
        %v441 = vld [vmem:[%s238 + $0x520] sm:$0xff]
        %v442 = vld [vmem:[%s238 + $0x528] sm:$0xff]
        %v443 = vld [vmem:[%s238 + $0x530] sm:$0xff]
        %v444 = vld [vmem:[%s238 + $0x538] sm:$0xff]
        %v445 = vld [vmem:[%s238 + $0x540] sm:$0xff]
        %v446 = vld [vmem:[%s238 + $0x548] sm:$0xff]
        %v447 = vld [vmem:[%s238 + $0x550] sm:$0xff]
        %v448 = vld [vmem:[%s238 + $0x558] sm:$0xff]
        %v449 = vld [vmem:[%s238 + $0x560] sm:$0xff]
        %v450 = vld [vmem:[%s238 + $0x568] sm:$0xff]
        %v451 = vld [vmem:[%s238 + $0x570] sm:$0xff]
        %v452 = vld [vmem:[%s238 + $0x578] sm:$0xff]
        %v453 = vld [vmem:[%s238 + $0x580] sm:$0xff]
        %v454 = vld [vmem:[%s238 + $0x588] sm:$0xff]
        %v455 = vld [vmem:[%s238 + $0x590] sm:$0xff]
        %v456 = vld [vmem:[%s238 + $0x598] sm:$0xff]
        %v457 = vld [vmem:[%s238 + $0x5a0] sm:$0xff]
        %v458 = vld [vmem:[%s238 + $0x5a8] sm:$0xff]
        %v459 = vld [vmem:[%s238 + $0x5b0] sm:$0xff]
        %v460 = vld [vmem:[%s238 + $0x5b8] sm:$0xff]
        %v461 = vld [vmem:[%s238 + $0x5c0] sm:$0xff]
        %v462 = vld [vmem:[%s238 + $0x5c8] sm:$0xff]
        %v463 = vld [vmem:[%s238 + $0x5d0] sm:$0xff]
        %v464 = vld [vmem:[%s238 + $0x5d8] sm:$0xff]
        %v465 = vld [vmem:[%s238 + $0x5e0] sm:$0xff]
        %v466 = vld [vmem:[%s238 + $0x5e8] sm:$0xff]
        %v467 = vld [vmem:[%s238 + $0x5f0] sm:$0xff]
        %v468 = vld [vmem:[%s238 + $0x5f8] sm:$0xff]
        %v469 = vunpack.c.l.bf16 %v277
        %v470 = vunpack.c.h.bf16 %v277
        %v471 = vunpack.c.l.bf16 %v278
        %v472 = vunpack.c.h.bf16 %v278
        %v473 = vunpack.c.l.bf16 %v279
        %v474 = vunpack.c.h.bf16 %v279
        %v475 = vunpack.c.l.bf16 %v280
        %v476 = vunpack.c.h.bf16 %v280
        %v477 = vunpack.c.l.bf16 %v281
        %v478 = vunpack.c.h.bf16 %v281
        %v479 = vunpack.c.l.bf16 %v282
        %v480 = vunpack.c.h.bf16 %v282
        %v481 = vunpack.c.l.bf16 %v283
        %v482 = vunpack.c.h.bf16 %v283
        %v483 = vunpack.c.l.bf16 %v284
        %v484 = vunpack.c.h.bf16 %v284
        %v485 = vunpack.c.l.bf16 %v285
        %v486 = vunpack.c.h.bf16 %v285
        %v487 = vunpack.c.l.bf16 %v286
        %v488 = vunpack.c.h.bf16 %v286
        %v489 = vunpack.c.l.bf16 %v287
        %v490 = vunpack.c.h.bf16 %v287
        %v491 = vunpack.c.l.bf16 %v288
        %v492 = vunpack.c.h.bf16 %v288
        %v493 = vunpack.c.l.bf16 %v289
        %v494 = vunpack.c.h.bf16 %v289
        %v495 = vunpack.c.l.bf16 %v290
        %v496 = vunpack.c.h.bf16 %v290
        %v497 = vunpack.c.l.bf16 %v291
        %v498 = vunpack.c.h.bf16 %v291
        %v499 = vunpack.c.l.bf16 %v292
        %v500 = vunpack.c.h.bf16 %v292
        %v501 = vunpack.c.l.bf16 %v293
        %v502 = vunpack.c.h.bf16 %v293
        %v503 = vunpack.c.l.bf16 %v294
        %v504 = vunpack.c.h.bf16 %v294
        %v505 = vunpack.c.l.bf16 %v295
        %v506 = vunpack.c.h.bf16 %v295
        %v507 = vunpack.c.l.bf16 %v296
        %v508 = vunpack.c.h.bf16 %v296
        %v509 = vunpack.c.l.bf16 %v297
        %v510 = vunpack.c.h.bf16 %v297
        %v511 = vunpack.c.l.bf16 %v298
        %v512 = vunpack.c.h.bf16 %v298
        %v513 = vunpack.c.l.bf16 %v299
        %v514 = vunpack.c.h.bf16 %v299
        %v515 = vunpack.c.l.bf16 %v300
        %v516 = vunpack.c.h.bf16 %v300
        %v517 = vunpack.c.l.bf16 %v301
        %v518 = vunpack.c.h.bf16 %v301
        %v519 = vunpack.c.l.bf16 %v302
        %v520 = vunpack.c.h.bf16 %v302
        %v521 = vunpack.c.l.bf16 %v303
        %v522 = vunpack.c.h.bf16 %v303
        %v523 = vunpack.c.l.bf16 %v304
        %v524 = vunpack.c.h.bf16 %v304
        %v525 = vunpack.c.l.bf16 %v305
        %v526 = vunpack.c.h.bf16 %v305
        %v527 = vunpack.c.l.bf16 %v306
        %v528 = vunpack.c.h.bf16 %v306
        %v529 = vunpack.c.l.bf16 %v307
        %v530 = vunpack.c.h.bf16 %v307
        %v531 = vunpack.c.l.bf16 %v308
        %v532 = vunpack.c.h.bf16 %v308
        %v533 = vunpack.c.l.bf16 %v309
        %v534 = vunpack.c.h.bf16 %v309
        %v535 = vunpack.c.l.bf16 %v310
        %v536 = vunpack.c.h.bf16 %v310
        %v537 = vunpack.c.l.bf16 %v311
        %v538 = vunpack.c.h.bf16 %v311
        %v539 = vunpack.c.l.bf16 %v312
        %v540 = vunpack.c.h.bf16 %v312
        %v541 = vunpack.c.l.bf16 %v313
        %v542 = vunpack.c.h.bf16 %v313
        %v543 = vunpack.c.l.bf16 %v314
        %v544 = vunpack.c.h.bf16 %v314
        %v545 = vunpack.c.l.bf16 %v315
        %v546 = vunpack.c.h.bf16 %v315
        %v547 = vunpack.c.l.bf16 %v316
        %v548 = vunpack.c.h.bf16 %v316
        %v549 = vunpack.c.l.bf16 %v317
        %v550 = vunpack.c.h.bf16 %v317
        %v551 = vunpack.c.l.bf16 %v318
        %v552 = vunpack.c.h.bf16 %v318
        %v553 = vunpack.c.l.bf16 %v319
        %v554 = vunpack.c.h.bf16 %v319
        %v555 = vunpack.c.l.bf16 %v320
        %v556 = vunpack.c.h.bf16 %v320
        %v557 = vunpack.c.l.bf16 %v321
        %v558 = vunpack.c.h.bf16 %v321
        %v559 = vunpack.c.l.bf16 %v322
        %v560 = vunpack.c.h.bf16 %v322
        %v561 = vunpack.c.l.bf16 %v323
        %v562 = vunpack.c.h.bf16 %v323
        %v563 = vunpack.c.l.bf16 %v324
        %v564 = vunpack.c.h.bf16 %v324
        %v565 = vunpack.c.l.bf16 %v325
        %v566 = vunpack.c.h.bf16 %v325
        %v567 = vunpack.c.l.bf16 %v326
        %v568 = vunpack.c.h.bf16 %v326
        %v569 = vunpack.c.l.bf16 %v327
        %v570 = vunpack.c.h.bf16 %v327
        %v571 = vunpack.c.l.bf16 %v328
        %v572 = vunpack.c.h.bf16 %v328
        %v573 = vunpack.c.l.bf16 %v329
        %v574 = vunpack.c.h.bf16 %v329
        %v575 = vunpack.c.l.bf16 %v330
        %v576 = vunpack.c.h.bf16 %v330
        %v577 = vunpack.c.l.bf16 %v331
        %v578 = vunpack.c.h.bf16 %v331
        %v579 = vunpack.c.l.bf16 %v332
        %v580 = vunpack.c.h.bf16 %v332
        %v581 = vunpack.c.l.bf16 %v333
        %v582 = vunpack.c.h.bf16 %v333
        %v583 = vunpack.c.l.bf16 %v334
        %v584 = vunpack.c.h.bf16 %v334
        %v585 = vunpack.c.l.bf16 %v335
        %v586 = vunpack.c.h.bf16 %v335
        %v587 = vunpack.c.l.bf16 %v336
        %v588 = vunpack.c.h.bf16 %v336
        %v589 = vunpack.c.l.bf16 %v337
        %v590 = vunpack.c.h.bf16 %v337
        %v591 = vunpack.c.l.bf16 %v338
        %v592 = vunpack.c.h.bf16 %v338
        %v593 = vunpack.c.l.bf16 %v339
        %v594 = vunpack.c.h.bf16 %v339
        %v595 = vunpack.c.l.bf16 %v340
        %v596 = vunpack.c.h.bf16 %v340
        %v597 = vunpack.c.l.bf16 %v341
        %v598 = vunpack.c.h.bf16 %v341
        %v599 = vunpack.c.l.bf16 %v342
        %v600 = vunpack.c.h.bf16 %v342
        %v601 = vunpack.c.l.bf16 %v343
        %v602 = vunpack.c.h.bf16 %v343
        %v603 = vunpack.c.l.bf16 %v344
        %v604 = vunpack.c.h.bf16 %v344
        %v605 = vunpack.c.l.bf16 %v345
        %v606 = vunpack.c.h.bf16 %v345
        %v607 = vunpack.c.l.bf16 %v346
        %v608 = vunpack.c.h.bf16 %v346
        %v609 = vunpack.c.l.bf16 %v347
        %v610 = vunpack.c.h.bf16 %v347
        %v611 = vunpack.c.l.bf16 %v348
        %v612 = vunpack.c.h.bf16 %v348
        %v613 = vunpack.c.l.bf16 %v349
        %v614 = vunpack.c.h.bf16 %v349
        %v615 = vunpack.c.l.bf16 %v350
        %v616 = vunpack.c.h.bf16 %v350
        %v617 = vunpack.c.l.bf16 %v351
        %v618 = vunpack.c.h.bf16 %v351
        %v619 = vunpack.c.l.bf16 %v352
        %v620 = vunpack.c.h.bf16 %v352
        %v621 = vunpack.c.l.bf16 %v353
        %v622 = vunpack.c.h.bf16 %v353
        %v623 = vunpack.c.l.bf16 %v354
        %v624 = vunpack.c.h.bf16 %v354
        %v625 = vunpack.c.l.bf16 %v355
        %v626 = vunpack.c.h.bf16 %v355
        %v627 = vunpack.c.l.bf16 %v356
        %v628 = vunpack.c.h.bf16 %v356
        %v629 = vunpack.c.l.bf16 %v357
        %v630 = vunpack.c.h.bf16 %v357
        %v631 = vunpack.c.l.bf16 %v358
        %v632 = vunpack.c.h.bf16 %v358
        %v633 = vunpack.c.l.bf16 %v359
        %v634 = vunpack.c.h.bf16 %v359
        %v635 = vunpack.c.l.bf16 %v360
        %v636 = vunpack.c.h.bf16 %v360
        %v637 = vunpack.c.l.bf16 %v361
        %v638 = vunpack.c.h.bf16 %v361
        %v639 = vunpack.c.l.bf16 %v362
        %v640 = vunpack.c.h.bf16 %v362
        %v641 = vunpack.c.l.bf16 %v363
        %v642 = vunpack.c.h.bf16 %v363
        %v643 = vunpack.c.l.bf16 %v364
        %v644 = vunpack.c.h.bf16 %v364
        %v645 = vunpack.c.l.bf16 %v365
        %v646 = vunpack.c.h.bf16 %v365
        %v647 = vunpack.c.l.bf16 %v366
        %v648 = vunpack.c.h.bf16 %v366
        %v649 = vunpack.c.l.bf16 %v367
        %v650 = vunpack.c.h.bf16 %v367
        %v651 = vunpack.c.l.bf16 %v368
        %v652 = vunpack.c.h.bf16 %v368
        %v653 = vunpack.c.l.bf16 %v369
        %v654 = vunpack.c.h.bf16 %v369
        %v655 = vunpack.c.l.bf16 %v370
        %v656 = vunpack.c.h.bf16 %v370
        %v657 = vunpack.c.l.bf16 %v371
        %v658 = vunpack.c.h.bf16 %v371
        %v659 = vunpack.c.l.bf16 %v372
        %v660 = vunpack.c.h.bf16 %v372
        %v661 = vunpack.c.l.bf16 %v373
        %v662 = vunpack.c.h.bf16 %v373
        %v663 = vunpack.c.l.bf16 %v374
        %v664 = vunpack.c.h.bf16 %v374
        %v665 = vunpack.c.l.bf16 %v375
        %v666 = vunpack.c.h.bf16 %v375
        %v667 = vunpack.c.l.bf16 %v376
        %v668 = vunpack.c.h.bf16 %v376
        %v669 = vunpack.c.l.bf16 %v377
        %v670 = vunpack.c.h.bf16 %v377
        %v671 = vunpack.c.l.bf16 %v378
        %v672 = vunpack.c.h.bf16 %v378
        %v673 = vunpack.c.l.bf16 %v379
        %v674 = vunpack.c.h.bf16 %v379
        %v675 = vunpack.c.l.bf16 %v380
        %v676 = vunpack.c.h.bf16 %v380
        %v677 = vunpack.c.l.bf16 %v381
        %v678 = vunpack.c.h.bf16 %v381
        %v679 = vunpack.c.l.bf16 %v382
        %v680 = vunpack.c.h.bf16 %v382
        %v681 = vunpack.c.l.bf16 %v383
        %v682 = vunpack.c.h.bf16 %v383
        %v683 = vunpack.c.l.bf16 %v384
        %v684 = vunpack.c.h.bf16 %v384
        %v685 = vunpack.c.l.bf16 %v385
        %v686 = vunpack.c.h.bf16 %v385
        %v687 = vunpack.c.l.bf16 %v386
        %v688 = vunpack.c.h.bf16 %v386
        %v689 = vunpack.c.l.bf16 %v387
        %v690 = vunpack.c.h.bf16 %v387
        %v691 = vunpack.c.l.bf16 %v388
        %v692 = vunpack.c.h.bf16 %v388
        %v693 = vunpack.c.l.bf16 %v389
        %v694 = vunpack.c.h.bf16 %v389
        %v695 = vunpack.c.l.bf16 %v390
        %v696 = vunpack.c.h.bf16 %v390
        %v697 = vunpack.c.l.bf16 %v391
        %v698 = vunpack.c.h.bf16 %v391
        %v699 = vunpack.c.l.bf16 %v392
        %v700 = vunpack.c.h.bf16 %v392
        %v701 = vunpack.c.l.bf16 %v393
        %v702 = vunpack.c.h.bf16 %v393
        %v703 = vunpack.c.l.bf16 %v394
        %v704 = vunpack.c.h.bf16 %v394
        %v705 = vunpack.c.l.bf16 %v395
        %v706 = vunpack.c.h.bf16 %v395
        %v707 = vunpack.c.l.bf16 %v396
        %v708 = vunpack.c.h.bf16 %v396
        %v709 = vunpack.c.l.bf16 %v397
        %v710 = vunpack.c.h.bf16 %v397
        %v711 = vunpack.c.l.bf16 %v398
        %v712 = vunpack.c.h.bf16 %v398
        %v713 = vunpack.c.l.bf16 %v399
        %v714 = vunpack.c.h.bf16 %v399
        %v715 = vunpack.c.l.bf16 %v400
        %v716 = vunpack.c.h.bf16 %v400
        %v717 = vunpack.c.l.bf16 %v401
        %v718 = vunpack.c.h.bf16 %v401
        %v719 = vunpack.c.l.bf16 %v402
        %v720 = vunpack.c.h.bf16 %v402
        %v721 = vunpack.c.l.bf16 %v403
        %v722 = vunpack.c.h.bf16 %v403
        %v723 = vunpack.c.l.bf16 %v404
        %v724 = vunpack.c.h.bf16 %v404
        %v725 = vunpack.c.l.bf16 %v405
        %v726 = vunpack.c.h.bf16 %v405
        %v727 = vunpack.c.l.bf16 %v406
        %v728 = vunpack.c.h.bf16 %v406
        %v729 = vunpack.c.l.bf16 %v407
        %v730 = vunpack.c.h.bf16 %v407
        %v731 = vunpack.c.l.bf16 %v408
        %v732 = vunpack.c.h.bf16 %v408
        %v733 = vunpack.c.l.bf16 %v409
        %v734 = vunpack.c.h.bf16 %v409
        %v735 = vunpack.c.l.bf16 %v410
        %v736 = vunpack.c.h.bf16 %v410
        %v737 = vunpack.c.l.bf16 %v411
        %v738 = vunpack.c.h.bf16 %v411
        %v739 = vunpack.c.l.bf16 %v412
        %v740 = vunpack.c.h.bf16 %v412
        %v741 = vunpack.c.l.bf16 %v413
        %v742 = vunpack.c.h.bf16 %v413
        %v743 = vunpack.c.l.bf16 %v414
        %v744 = vunpack.c.h.bf16 %v414
        %v745 = vunpack.c.l.bf16 %v415
        %v746 = vunpack.c.h.bf16 %v415
        %v747 = vunpack.c.l.bf16 %v416
        %v748 = vunpack.c.h.bf16 %v416
        %v749 = vunpack.c.l.bf16 %v417
        %v750 = vunpack.c.h.bf16 %v417
        %v751 = vunpack.c.l.bf16 %v418
        %v752 = vunpack.c.h.bf16 %v418
        %v753 = vunpack.c.l.bf16 %v419
        %v754 = vunpack.c.h.bf16 %v419
        %v755 = vunpack.c.l.bf16 %v420
        %v756 = vunpack.c.h.bf16 %v420
        %v757 = vunpack.c.l.bf16 %v421
        %v758 = vunpack.c.h.bf16 %v421
        %v759 = vunpack.c.l.bf16 %v422
        %v760 = vunpack.c.h.bf16 %v422
        %v761 = vunpack.c.l.bf16 %v423
        %v762 = vunpack.c.h.bf16 %v423
        %v763 = vunpack.c.l.bf16 %v424
        %v764 = vunpack.c.h.bf16 %v424
        %v765 = vunpack.c.l.bf16 %v425
        %v766 = vunpack.c.h.bf16 %v425
        %v767 = vunpack.c.l.bf16 %v426
        %v768 = vunpack.c.h.bf16 %v426
        %v769 = vunpack.c.l.bf16 %v427
        %v770 = vunpack.c.h.bf16 %v427
        %v771 = vunpack.c.l.bf16 %v428
        %v772 = vunpack.c.h.bf16 %v428
        %v773 = vunpack.c.l.bf16 %v429
        %v774 = vunpack.c.h.bf16 %v429
        %v775 = vunpack.c.l.bf16 %v430
        %v776 = vunpack.c.h.bf16 %v430
        %v777 = vunpack.c.l.bf16 %v431
        %v778 = vunpack.c.h.bf16 %v431
        %v779 = vunpack.c.l.bf16 %v432
        %v780 = vunpack.c.h.bf16 %v432
        %v781 = vunpack.c.l.bf16 %v433
        %v782 = vunpack.c.h.bf16 %v433
        %v783 = vunpack.c.l.bf16 %v434
        %v784 = vunpack.c.h.bf16 %v434
        %v785 = vunpack.c.l.bf16 %v435
        %v786 = vunpack.c.h.bf16 %v435
        %v787 = vunpack.c.l.bf16 %v436
        %v788 = vunpack.c.h.bf16 %v436
        %v789 = vunpack.c.l.bf16 %v437
        %v790 = vunpack.c.h.bf16 %v437
        %v791 = vunpack.c.l.bf16 %v438
        %v792 = vunpack.c.h.bf16 %v438
        %v793 = vunpack.c.l.bf16 %v439
        %v794 = vunpack.c.h.bf16 %v439
        %v795 = vunpack.c.l.bf16 %v440
        %v796 = vunpack.c.h.bf16 %v440
        %v797 = vunpack.c.l.bf16 %v441
        %v798 = vunpack.c.h.bf16 %v441
        %v799 = vunpack.c.l.bf16 %v442
        %v800 = vunpack.c.h.bf16 %v442
        %v801 = vunpack.c.l.bf16 %v443
        %v802 = vunpack.c.h.bf16 %v443
        %v803 = vunpack.c.l.bf16 %v444
        %v804 = vunpack.c.h.bf16 %v444
        %v805 = vunpack.c.l.bf16 %v445
        %v806 = vunpack.c.h.bf16 %v445
        %v807 = vunpack.c.l.bf16 %v446
        %v808 = vunpack.c.h.bf16 %v446
        %v809 = vunpack.c.l.bf16 %v447
        %v810 = vunpack.c.h.bf16 %v447
        %v811 = vunpack.c.l.bf16 %v448
        %v812 = vunpack.c.h.bf16 %v448
        %v813 = vunpack.c.l.bf16 %v449
        %v814 = vunpack.c.h.bf16 %v449
        %v815 = vunpack.c.l.bf16 %v450
        %v816 = vunpack.c.h.bf16 %v450
        %v817 = vunpack.c.l.bf16 %v451
        %v818 = vunpack.c.h.bf16 %v451
        %v819 = vunpack.c.l.bf16 %v452
        %v820 = vunpack.c.h.bf16 %v452
        %v821 = vunpack.c.l.bf16 %v453
        %v822 = vunpack.c.h.bf16 %v453
        %v823 = vunpack.c.l.bf16 %v454
        %v824 = vunpack.c.h.bf16 %v454
        %v825 = vunpack.c.l.bf16 %v455
        %v826 = vunpack.c.h.bf16 %v455
        %v827 = vunpack.c.l.bf16 %v456
        %v828 = vunpack.c.h.bf16 %v456
        %v829 = vunpack.c.l.bf16 %v457
        %v830 = vunpack.c.h.bf16 %v457
        %v831 = vunpack.c.l.bf16 %v458
        %v832 = vunpack.c.h.bf16 %v458
        %v833 = vunpack.c.l.bf16 %v459
        %v834 = vunpack.c.h.bf16 %v459
        %v835 = vunpack.c.l.bf16 %v460
        %v836 = vunpack.c.h.bf16 %v460
        %v837 = vunpack.c.l.bf16 %v461
        %v838 = vunpack.c.h.bf16 %v461
        %v839 = vunpack.c.l.bf16 %v462
        %v840 = vunpack.c.h.bf16 %v462
        %v841 = vunpack.c.l.bf16 %v463
        %v842 = vunpack.c.h.bf16 %v463
        %v843 = vunpack.c.l.bf16 %v464
        %v844 = vunpack.c.h.bf16 %v464
        %v845 = vunpack.c.l.bf16 %v465
        %v846 = vunpack.c.h.bf16 %v465
        %v847 = vunpack.c.l.bf16 %v466
        %v848 = vunpack.c.h.bf16 %v466
        %v849 = vunpack.c.l.bf16 %v467
        %v850 = vunpack.c.h.bf16 %v467
        %v851 = vunpack.c.l.bf16 %v468
        %v852 = vunpack.c.h.bf16 %v468
        %v853 = vld [vmem:[%s1] sm:$0xff]
        %v854 = vld [vmem:[%s1 + $0x8] sm:$0xff]
        %v855 = vld [vmem:[%s1 + $0x10] sm:$0xff]
        %v856 = vld [vmem:[%s1 + $0x18] sm:$0xff]
        %v857 = vld [vmem:[%s1 + $0x20] sm:$0xff]
        %v858 = vld [vmem:[%s1 + $0x28] sm:$0xff]
        %v859 = vld [vmem:[%s1 + $0x30] sm:$0xff]
        %v860 = vld [vmem:[%s1 + $0x38] sm:$0xff]
        %v861 = vld [vmem:[%s1 + $0x40] sm:$0xff]
        %v862 = vld [vmem:[%s1 + $0x48] sm:$0xff]
        %v863 = vld [vmem:[%s1 + $0x50] sm:$0xff]
        %v864 = vld [vmem:[%s1 + $0x58] sm:$0xff]
        %v865 = vld [vmem:[%s1 + $0x60] sm:$0xff]
        %v866 = vld [vmem:[%s1 + $0x68] sm:$0xff]
        %v867 = vld [vmem:[%s1 + $0x70] sm:$0xff]
        %v868 = vld [vmem:[%s1 + $0x78] sm:$0xff]
        %v869 = vld [vmem:[%s1 + $0x80] sm:$0xff]
        %v870 = vld [vmem:[%s1 + $0x88] sm:$0xff]
        %v871 = vld [vmem:[%s1 + $0x90] sm:$0xff]
        %v872 = vld [vmem:[%s1 + $0x98] sm:$0xff]
        %v873 = vld [vmem:[%s1 + $0xa0] sm:$0xff]
        %v874 = vld [vmem:[%s1 + $0xa8] sm:$0xff]
        %v875 = vld [vmem:[%s1 + $0xb0] sm:$0xff]
        %v876 = vld [vmem:[%s1 + $0xb8] sm:$0xff]
        %v877 = vld [vmem:[%s1 + $0xc0] sm:$0xff]
        %v878 = vld [vmem:[%s1 + $0xc8] sm:$0xff]
        %v879 = vld [vmem:[%s1 + $0xd0] sm:$0xff]
        %v880 = vld [vmem:[%s1 + $0xd8] sm:$0xff]
        %v881 = vld [vmem:[%s1 + $0xe0] sm:$0xff]
        %v882 = vld [vmem:[%s1 + $0xe8] sm:$0xff]
        %v883 = vld [vmem:[%s1 + $0xf0] sm:$0xff]
        %v884 = vld [vmem:[%s1 + $0xf8] sm:$0xff]
        %v885 = vld [vmem:[%s1 + $0x100] sm:$0xff]
        %v886 = vld [vmem:[%s1 + $0x108] sm:$0xff]
        %v887 = vld [vmem:[%s1 + $0x110] sm:$0xff]
        %v888 = vld [vmem:[%s1 + $0x118] sm:$0xff]
        %v889 = vld [vmem:[%s1 + $0x120] sm:$0xff]
        %v890 = vld [vmem:[%s1 + $0x128] sm:$0xff]
        %v891 = vld [vmem:[%s1 + $0x130] sm:$0xff]
        %v892 = vld [vmem:[%s1 + $0x138] sm:$0xff]
        %v893 = vld [vmem:[%s1 + $0x140] sm:$0xff]
        %v894 = vld [vmem:[%s1 + $0x148] sm:$0xff]
        %v895 = vld [vmem:[%s1 + $0x150] sm:$0xff]
        %v896 = vld [vmem:[%s1 + $0x158] sm:$0xff]
        %v897 = vld [vmem:[%s1 + $0x160] sm:$0xff]
        %v898 = vld [vmem:[%s1 + $0x168] sm:$0xff]
        %v899 = vld [vmem:[%s1 + $0x170] sm:$0xff]
        %v900 = vld [vmem:[%s1 + $0x178] sm:$0xff]
        %v901 = vld [vmem:[%s1 + $0x180] sm:$0xff]
        %v902 = vld [vmem:[%s1 + $0x188] sm:$0xff]
        %v903 = vld [vmem:[%s1 + $0x190] sm:$0xff]
        %v904 = vld [vmem:[%s1 + $0x198] sm:$0xff]
        %v905 = vld [vmem:[%s1 + $0x1a0] sm:$0xff]
        %v906 = vld [vmem:[%s1 + $0x1a8] sm:$0xff]
        %v907 = vld [vmem:[%s1 + $0x1b0] sm:$0xff]
        %v908 = vld [vmem:[%s1 + $0x1b8] sm:$0xff]
        %v909 = vld [vmem:[%s1 + $0x1c0] sm:$0xff]
        %v910 = vld [vmem:[%s1 + $0x1c8] sm:$0xff]
        %v911 = vld [vmem:[%s1 + $0x1d0] sm:$0xff]
        %v912 = vld [vmem:[%s1 + $0x1d8] sm:$0xff]
        %v913 = vld [vmem:[%s1 + $0x1e0] sm:$0xff]
        %v914 = vld [vmem:[%s1 + $0x1e8] sm:$0xff]
        %v915 = vld [vmem:[%s1 + $0x1f0] sm:$0xff]
        %v916 = vld [vmem:[%s1 + $0x1f8] sm:$0xff]
        %v917 = vld [vmem:[%s1 + $0x200] sm:$0xff]
        %v918 = vld [vmem:[%s1 + $0x208] sm:$0xff]
        %v919 = vld [vmem:[%s1 + $0x210] sm:$0xff]
        %v920 = vld [vmem:[%s1 + $0x218] sm:$0xff]
        %v921 = vld [vmem:[%s1 + $0x220] sm:$0xff]
        %v922 = vld [vmem:[%s1 + $0x228] sm:$0xff]
        %v923 = vld [vmem:[%s1 + $0x230] sm:$0xff]
        %v924 = vld [vmem:[%s1 + $0x238] sm:$0xff]
        %v925 = vld [vmem:[%s1 + $0x240] sm:$0xff]
        %v926 = vld [vmem:[%s1 + $0x248] sm:$0xff]
        %v927 = vld [vmem:[%s1 + $0x250] sm:$0xff]
        %v928 = vld [vmem:[%s1 + $0x258] sm:$0xff]
        %v929 = vld [vmem:[%s1 + $0x260] sm:$0xff]
        %v930 = vld [vmem:[%s1 + $0x268] sm:$0xff]
        %v931 = vld [vmem:[%s1 + $0x270] sm:$0xff]
        %v932 = vld [vmem:[%s1 + $0x278] sm:$0xff]
        %v933 = vld [vmem:[%s1 + $0x280] sm:$0xff]
        %v934 = vld [vmem:[%s1 + $0x288] sm:$0xff]
        %v935 = vld [vmem:[%s1 + $0x290] sm:$0xff]
        %v936 = vld [vmem:[%s1 + $0x298] sm:$0xff]
        %v937 = vld [vmem:[%s1 + $0x2a0] sm:$0xff]
        %v938 = vld [vmem:[%s1 + $0x2a8] sm:$0xff]
        %v939 = vld [vmem:[%s1 + $0x2b0] sm:$0xff]
        %v940 = vld [vmem:[%s1 + $0x2b8] sm:$0xff]
        %v941 = vld [vmem:[%s1 + $0x2c0] sm:$0xff]
        %v942 = vld [vmem:[%s1 + $0x2c8] sm:$0xff]
        %v943 = vld [vmem:[%s1 + $0x2d0] sm:$0xff]
        %v944 = vld [vmem:[%s1 + $0x2d8] sm:$0xff]
        %v945 = vld [vmem:[%s1 + $0x2e0] sm:$0xff]
        %v946 = vld [vmem:[%s1 + $0x2e8] sm:$0xff]
        %v947 = vld [vmem:[%s1 + $0x2f0] sm:$0xff]
        %v948 = vld [vmem:[%s1 + $0x2f8] sm:$0xff]
        %v949 = vld [vmem:[#allocation6] sm:$0x1]
        %v951 = vperm.slane %v949, 0
        %953 = vmatpush.msra.mxu0 %v868
        %954 = vmatpush.msra.mxu0 %v867
        %955 = vmatpush.msra.mxu0 %v866
        %956 = vmatpush.msra.mxu0 %v865
        %957 = vmatpush.msra.mxu0 %v864
        %958 = vmatpush.msra.mxu0 %v863
        %959 = vmatpush.msra.mxu0 %v862
        %960 = vmatpush.msra.mxu0 %v861
        %961 = vmatpush.msra.mxu0 %v860
        %962 = vmatpush.msra.mxu0 %v859
        %963 = vmatpush.msra.mxu0 %v858
        %964 = vmatpush.msra.mxu0 %v857
        %965 = vmatpush.msra.mxu0 %v856
        %966 = vmatpush.msra.mxu0 %v855
        %967 = vmatpush.msra.mxu0 %v854
        %968 = vmatpush.msra.mxu0 %v853
        %969 = vmatmul.f32.gmra.mxu0 %v469
        %v970 = vpop.f32.mrf.mxu0
        %v971 = vadd.f32 %v951, %v970
        %972 = vmatmul.f32.gmra.mxu0 %v475
        %v973 = vpop.f32.mrf.mxu0
        %v974 = vadd.f32 %v951, %v973
        %975 = vmatmul.f32.gmra.mxu0 %v481
        %v976 = vpop.f32.mrf.mxu0
        %v977 = vadd.f32 %v951, %v976
        %978 = vmatmul.f32.gmra.mxu0 %v487
        %v979 = vpop.f32.mrf.mxu0
        %v980 = vadd.f32 %v951, %v979
        %981 = vmatmul.f32.gmra.mxu0 %v493
        %v982 = vpop.f32.mrf.mxu0
        %v983 = vadd.f32 %v951, %v982
        %984 = vmatmul.f32.gmra.mxu0 %v499
        %v985 = vpop.f32.mrf.mxu0
        %v986 = vadd.f32 %v951, %v985
        %987 = vmatmul.f32.gmra.mxu0 %v505
        %v988 = vpop.f32.mrf.mxu0
        %v989 = vadd.f32 %v951, %v988
        %990 = vmatmul.f32.gmra.mxu0 %v511
        %v991 = vpop.f32.mrf.mxu0
        %v992 = vadd.f32 %v951, %v991
        %993 = vmatmul.f32.gmra.mxu0 %v517
        %v994 = vpop.f32.mrf.mxu0
        %v995 = vadd.f32 %v951, %v994
        %996 = vmatmul.f32.gmra.mxu0 %v523
        %v997 = vpop.f32.mrf.mxu0
        %v998 = vadd.f32 %v951, %v997
        %999 = vmatmul.f32.gmra.mxu0 %v529
        %v1000 = vpop.f32.mrf.mxu0
        %v1001 = vadd.f32 %v951, %v1000
        %1002 = vmatmul.f32.gmra.mxu0 %v535
        %v1003 = vpop.f32.mrf.mxu0
        %v1004 = vadd.f32 %v951, %v1003
        %1005 = vmatmul.f32.gmra.mxu0 %v541
        %v1006 = vpop.f32.mrf.mxu0
        %v1007 = vadd.f32 %v951, %v1006
        %1008 = vmatmul.f32.gmra.mxu0 %v547
        %v1009 = vpop.f32.mrf.mxu0
        %v1010 = vadd.f32 %v951, %v1009
        %1011 = vmatmul.f32.gmra.mxu0 %v553
        %v1012 = vpop.f32.mrf.mxu0
        %v1013 = vadd.f32 %v951, %v1012
        %1014 = vmatmul.f32.gmra.mxu0 %v559
        %v1015 = vpop.f32.mrf.mxu0
        %v1016 = vadd.f32 %v951, %v1015
        %1017 = vmatmul.f32.gmra.mxu0 %v565
        %v1018 = vpop.f32.mrf.mxu0
        %v1019 = vadd.f32 %v951, %v1018
        %1020 = vmatmul.f32.gmra.mxu0 %v571
        %v1021 = vpop.f32.mrf.mxu0
        %v1022 = vadd.f32 %v951, %v1021
        %1023 = vmatmul.f32.gmra.mxu0 %v577
        %v1024 = vpop.f32.mrf.mxu0
        %v1025 = vadd.f32 %v951, %v1024
        %1026 = vmatmul.f32.gmra.mxu0 %v583
        %v1027 = vpop.f32.mrf.mxu0
        %v1028 = vadd.f32 %v951, %v1027
        %1029 = vmatmul.f32.gmra.mxu0 %v589
        %v1030 = vpop.f32.mrf.mxu0
        %v1031 = vadd.f32 %v951, %v1030
        %1032 = vmatmul.f32.gmra.mxu0 %v595
        %v1033 = vpop.f32.mrf.mxu0
        %v1034 = vadd.f32 %v951, %v1033
        %1035 = vmatmul.f32.gmra.mxu0 %v601
        %v1036 = vpop.f32.mrf.mxu0
        %v1037 = vadd.f32 %v951, %v1036
        %1038 = vmatmul.f32.gmra.mxu0 %v607
        %v1039 = vpop.f32.mrf.mxu0
        %v1040 = vadd.f32 %v951, %v1039
        %1041 = vmatmul.f32.gmra.mxu0 %v613
        %v1042 = vpop.f32.mrf.mxu0
        %v1043 = vadd.f32 %v951, %v1042
        %1044 = vmatmul.f32.gmra.mxu0 %v619
        %v1045 = vpop.f32.mrf.mxu0
        %v1046 = vadd.f32 %v951, %v1045
        %1047 = vmatmul.f32.gmra.mxu0 %v625
        %v1048 = vpop.f32.mrf.mxu0
        %v1049 = vadd.f32 %v951, %v1048
        %1050 = vmatmul.f32.gmra.mxu0 %v631
        %v1051 = vpop.f32.mrf.mxu0
        %v1052 = vadd.f32 %v951, %v1051
        %1053 = vmatmul.f32.gmra.mxu0 %v637
        %v1054 = vpop.f32.mrf.mxu0
        %v1055 = vadd.f32 %v951, %v1054
        %1056 = vmatmul.f32.gmra.mxu0 %v643
        %v1057 = vpop.f32.mrf.mxu0
        %v1058 = vadd.f32 %v951, %v1057
        %1059 = vmatmul.f32.gmra.mxu0 %v649
        %v1060 = vpop.f32.mrf.mxu0
        %v1061 = vadd.f32 %v951, %v1060
        %1062 = vmatmul.f32.gmra.mxu0 %v655
        %v1063 = vpop.f32.mrf.mxu0
        %v1064 = vadd.f32 %v951, %v1063
        %1065 = vmatmul.f32.gmra.mxu0 %v661
        %v1066 = vpop.f32.mrf.mxu0
        %v1067 = vadd.f32 %v951, %v1066
        %1068 = vmatmul.f32.gmra.mxu0 %v667
        %v1069 = vpop.f32.mrf.mxu0
        %v1070 = vadd.f32 %v951, %v1069
        %1071 = vmatmul.f32.gmra.mxu0 %v673
        %v1072 = vpop.f32.mrf.mxu0
        %v1073 = vadd.f32 %v951, %v1072
        %1074 = vmatmul.f32.gmra.mxu0 %v679
        %v1075 = vpop.f32.mrf.mxu0
        %v1076 = vadd.f32 %v951, %v1075
        %1077 = vmatmul.f32.gmra.mxu0 %v685
        %v1078 = vpop.f32.mrf.mxu0
        %v1079 = vadd.f32 %v951, %v1078
        %1080 = vmatmul.f32.gmra.mxu0 %v691
        %v1081 = vpop.f32.mrf.mxu0
        %v1082 = vadd.f32 %v951, %v1081
        %1083 = vmatmul.f32.gmra.mxu0 %v697
        %v1084 = vpop.f32.mrf.mxu0
        %v1085 = vadd.f32 %v951, %v1084
        %1086 = vmatmul.f32.gmra.mxu0 %v703
        %v1087 = vpop.f32.mrf.mxu0
        %v1088 = vadd.f32 %v951, %v1087
        %1089 = vmatmul.f32.gmra.mxu0 %v709
        %v1090 = vpop.f32.mrf.mxu0
        %v1091 = vadd.f32 %v951, %v1090
        %1092 = vmatmul.f32.gmra.mxu0 %v715
        %v1093 = vpop.f32.mrf.mxu0
        %v1094 = vadd.f32 %v951, %v1093
        %1095 = vmatmul.f32.gmra.mxu0 %v721
        %v1096 = vpop.f32.mrf.mxu0
        %v1097 = vadd.f32 %v951, %v1096
        %1098 = vmatmul.f32.gmra.mxu0 %v727
        %v1099 = vpop.f32.mrf.mxu0
        %v1100 = vadd.f32 %v951, %v1099
        %1101 = vmatmul.f32.gmra.mxu0 %v733
        %v1102 = vpop.f32.mrf.mxu0
        %v1103 = vadd.f32 %v951, %v1102
        %1104 = vmatmul.f32.gmra.mxu0 %v739
        %v1105 = vpop.f32.mrf.mxu0
        %v1106 = vadd.f32 %v951, %v1105
        %1107 = vmatmul.f32.gmra.mxu0 %v745
        %v1108 = vpop.f32.mrf.mxu0
        %v1109 = vadd.f32 %v951, %v1108
        %1110 = vmatmul.f32.gmra.mxu0 %v751
        %v1111 = vpop.f32.mrf.mxu0
        %v1112 = vadd.f32 %v951, %v1111
        %1113 = vmatmul.f32.gmra.mxu0 %v757
        %v1114 = vpop.f32.mrf.mxu0
        %v1115 = vadd.f32 %v951, %v1114
        %1116 = vmatmul.f32.gmra.mxu0 %v763
        %v1117 = vpop.f32.mrf.mxu0
        %v1118 = vadd.f32 %v951, %v1117
        %1119 = vmatmul.f32.gmra.mxu0 %v769
        %v1120 = vpop.f32.mrf.mxu0
        %v1121 = vadd.f32 %v951, %v1120
        %1122 = vmatmul.f32.gmra.mxu0 %v775
        %v1123 = vpop.f32.mrf.mxu0
        %v1124 = vadd.f32 %v951, %v1123
        %1125 = vmatmul.f32.gmra.mxu0 %v781
        %v1126 = vpop.f32.mrf.mxu0
        %v1127 = vadd.f32 %v951, %v1126
        %1128 = vmatmul.f32.gmra.mxu0 %v787
        %v1129 = vpop.f32.mrf.mxu0
        %v1130 = vadd.f32 %v951, %v1129
        %1131 = vmatmul.f32.gmra.mxu0 %v793
        %v1132 = vpop.f32.mrf.mxu0
        %v1133 = vadd.f32 %v951, %v1132
        %1134 = vmatmul.f32.gmra.mxu0 %v799
        %v1135 = vpop.f32.mrf.mxu0
        %v1136 = vadd.f32 %v951, %v1135
        %1137 = vmatmul.f32.gmra.mxu0 %v805
        %v1138 = vpop.f32.mrf.mxu0
        %v1139 = vadd.f32 %v951, %v1138
        %1140 = vmatmul.f32.gmra.mxu0 %v811
        %v1141 = vpop.f32.mrf.mxu0
        %v1142 = vadd.f32 %v951, %v1141
        %1143 = vmatmul.f32.gmra.mxu0 %v817
        %v1144 = vpop.f32.mrf.mxu0
        %v1145 = vadd.f32 %v951, %v1144
        %1146 = vmatmul.f32.gmra.mxu0 %v823
        %v1147 = vpop.f32.mrf.mxu0
        %v1148 = vadd.f32 %v951, %v1147
        %1149 = vmatmul.f32.gmra.mxu0 %v829
        %v1150 = vpop.f32.mrf.mxu0
        %v1151 = vadd.f32 %v951, %v1150
        %1152 = vmatmul.f32.gmra.mxu0 %v835
        %v1153 = vpop.f32.mrf.mxu0
        %v1154 = vadd.f32 %v951, %v1153
        %1155 = vmatmul.f32.gmra.mxu0 %v841
        %v1156 = vpop.f32.mrf.mxu0
        %v1157 = vadd.f32 %v951, %v1156
        %1158 = vmatmul.f32.gmra.mxu0 %v847
        %v1159 = vpop.f32.mrf.mxu0
        %v1160 = vadd.f32 %v951, %v1159
        %1161 = vdwg.mxu0
        %1162 = vmatpush.msra.mxu0 %v884
        %1163 = vmatpush.msra.mxu0 %v883
        %1164 = vmatpush.msra.mxu0 %v882
        %1165 = vmatpush.msra.mxu0 %v881
        %1166 = vmatpush.msra.mxu0 %v880
        %1167 = vmatpush.msra.mxu0 %v879
        %1168 = vmatpush.msra.mxu0 %v878
        %1169 = vmatpush.msra.mxu0 %v877
        %1170 = vmatpush.msra.mxu0 %v876
        %1171 = vmatpush.msra.mxu0 %v875
        %1172 = vmatpush.msra.mxu0 %v874
        %1173 = vmatpush.msra.mxu0 %v873
        %1174 = vmatpush.msra.mxu0 %v872
        %1175 = vmatpush.msra.mxu0 %v871
        %1176 = vmatpush.msra.mxu0 %v870
        %1177 = vmatpush.msra.mxu0 %v869
        %1178 = vmatmul.f32.gmra.mxu0 %v470
        %v1179 = vpop.f32.mrf.mxu0
        %v1180 = vadd.f32 %v971, %v1179
        %1181 = vmatmul.f32.gmra.mxu0 %v476
        %v1182 = vpop.f32.mrf.mxu0
        %v1183 = vadd.f32 %v974, %v1182
        %1184 = vmatmul.f32.gmra.mxu0 %v482
        %v1185 = vpop.f32.mrf.mxu0
        %v1186 = vadd.f32 %v977, %v1185
        %1187 = vmatmul.f32.gmra.mxu0 %v488
        %v1188 = vpop.f32.mrf.mxu0
        %v1189 = vadd.f32 %v980, %v1188
        %1190 = vmatmul.f32.gmra.mxu0 %v494
        %v1191 = vpop.f32.mrf.mxu0
        %v1192 = vadd.f32 %v983, %v1191
        %1193 = vmatmul.f32.gmra.mxu0 %v500
        %v1194 = vpop.f32.mrf.mxu0
        %v1195 = vadd.f32 %v986, %v1194
        %1196 = vmatmul.f32.gmra.mxu0 %v506
        %v1197 = vpop.f32.mrf.mxu0
        %v1198 = vadd.f32 %v989, %v1197
        %1199 = vmatmul.f32.gmra.mxu0 %v512
        %v1200 = vpop.f32.mrf.mxu0
        %v1201 = vadd.f32 %v992, %v1200
        %1202 = vmatmul.f32.gmra.mxu0 %v518
        %v1203 = vpop.f32.mrf.mxu0
        %v1204 = vadd.f32 %v995, %v1203
        %1205 = vmatmul.f32.gmra.mxu0 %v524
        %v1206 = vpop.f32.mrf.mxu0
        %v1207 = vadd.f32 %v998, %v1206
        %1208 = vmatmul.f32.gmra.mxu0 %v530
        %v1209 = vpop.f32.mrf.mxu0
        %v1210 = vadd.f32 %v1001, %v1209
        %1211 = vmatmul.f32.gmra.mxu0 %v536
        %v1212 = vpop.f32.mrf.mxu0
        %v1213 = vadd.f32 %v1004, %v1212
        %1214 = vmatmul.f32.gmra.mxu0 %v542
        %v1215 = vpop.f32.mrf.mxu0
        %v1216 = vadd.f32 %v1007, %v1215
        %1217 = vmatmul.f32.gmra.mxu0 %v548
        %v1218 = vpop.f32.mrf.mxu0
        %v1219 = vadd.f32 %v1010, %v1218
        %1220 = vmatmul.f32.gmra.mxu0 %v554
        %v1221 = vpop.f32.mrf.mxu0
        %v1222 = vadd.f32 %v1013, %v1221
        %1223 = vmatmul.f32.gmra.mxu0 %v560
        %v1224 = vpop.f32.mrf.mxu0
        %v1225 = vadd.f32 %v1016, %v1224
        %1226 = vmatmul.f32.gmra.mxu0 %v566
        %v1227 = vpop.f32.mrf.mxu0
        %v1228 = vadd.f32 %v1019, %v1227
        %1229 = vmatmul.f32.gmra.mxu0 %v572
        %v1230 = vpop.f32.mrf.mxu0
        %v1231 = vadd.f32 %v1022, %v1230
        %1232 = vmatmul.f32.gmra.mxu0 %v578
        %v1233 = vpop.f32.mrf.mxu0
        %v1234 = vadd.f32 %v1025, %v1233
        %1235 = vmatmul.f32.gmra.mxu0 %v584
        %v1236 = vpop.f32.mrf.mxu0
        %v1237 = vadd.f32 %v1028, %v1236
        %1238 = vmatmul.f32.gmra.mxu0 %v590
        %v1239 = vpop.f32.mrf.mxu0
        %v1240 = vadd.f32 %v1031, %v1239
        %1241 = vmatmul.f32.gmra.mxu0 %v596
        %v1242 = vpop.f32.mrf.mxu0
        %v1243 = vadd.f32 %v1034, %v1242
        %1244 = vmatmul.f32.gmra.mxu0 %v602
        %v1245 = vpop.f32.mrf.mxu0
        %v1246 = vadd.f32 %v1037, %v1245
        %1247 = vmatmul.f32.gmra.mxu0 %v608
        %v1248 = vpop.f32.mrf.mxu0
        %v1249 = vadd.f32 %v1040, %v1248
        %1250 = vmatmul.f32.gmra.mxu0 %v614
        %v1251 = vpop.f32.mrf.mxu0
        %v1252 = vadd.f32 %v1043, %v1251
        %1253 = vmatmul.f32.gmra.mxu0 %v620
        %v1254 = vpop.f32.mrf.mxu0
        %v1255 = vadd.f32 %v1046, %v1254
        %1256 = vmatmul.f32.gmra.mxu0 %v626
        %v1257 = vpop.f32.mrf.mxu0
        %v1258 = vadd.f32 %v1049, %v1257
        %1259 = vmatmul.f32.gmra.mxu0 %v632
        %v1260 = vpop.f32.mrf.mxu0
        %v1261 = vadd.f32 %v1052, %v1260
        %1262 = vmatmul.f32.gmra.mxu0 %v638
        %v1263 = vpop.f32.mrf.mxu0
        %v1264 = vadd.f32 %v1055, %v1263
        %1265 = vmatmul.f32.gmra.mxu0 %v644
        %v1266 = vpop.f32.mrf.mxu0
        %v1267 = vadd.f32 %v1058, %v1266
        %1268 = vmatmul.f32.gmra.mxu0 %v650
        %v1269 = vpop.f32.mrf.mxu0
        %v1270 = vadd.f32 %v1061, %v1269
        %1271 = vmatmul.f32.gmra.mxu0 %v656
        %v1272 = vpop.f32.mrf.mxu0
        %v1273 = vadd.f32 %v1064, %v1272
        %1274 = vmatmul.f32.gmra.mxu0 %v662
        %v1275 = vpop.f32.mrf.mxu0
        %v1276 = vadd.f32 %v1067, %v1275
        %1277 = vmatmul.f32.gmra.mxu0 %v668
        %v1278 = vpop.f32.mrf.mxu0
        %v1279 = vadd.f32 %v1070, %v1278
        %1280 = vmatmul.f32.gmra.mxu0 %v674
        %v1281 = vpop.f32.mrf.mxu0
        %v1282 = vadd.f32 %v1073, %v1281
        %1283 = vmatmul.f32.gmra.mxu0 %v680
        %v1284 = vpop.f32.mrf.mxu0
        %v1285 = vadd.f32 %v1076, %v1284
        %1286 = vmatmul.f32.gmra.mxu0 %v686
        %v1287 = vpop.f32.mrf.mxu0
        %v1288 = vadd.f32 %v1079, %v1287
        %1289 = vmatmul.f32.gmra.mxu0 %v692
        %v1290 = vpop.f32.mrf.mxu0
        %v1291 = vadd.f32 %v1082, %v1290
        %1292 = vmatmul.f32.gmra.mxu0 %v698
        %v1293 = vpop.f32.mrf.mxu0
        %v1294 = vadd.f32 %v1085, %v1293
        %1295 = vmatmul.f32.gmra.mxu0 %v704
        %v1296 = vpop.f32.mrf.mxu0
        %v1297 = vadd.f32 %v1088, %v1296
        %1298 = vmatmul.f32.gmra.mxu0 %v710
        %v1299 = vpop.f32.mrf.mxu0
        %v1300 = vadd.f32 %v1091, %v1299
        %1301 = vmatmul.f32.gmra.mxu0 %v716
        %v1302 = vpop.f32.mrf.mxu0
        %v1303 = vadd.f32 %v1094, %v1302
        %1304 = vmatmul.f32.gmra.mxu0 %v722
        %v1305 = vpop.f32.mrf.mxu0
        %v1306 = vadd.f32 %v1097, %v1305
        %1307 = vmatmul.f32.gmra.mxu0 %v728
        %v1308 = vpop.f32.mrf.mxu0
        %v1309 = vadd.f32 %v1100, %v1308
        %1310 = vmatmul.f32.gmra.mxu0 %v734
        %v1311 = vpop.f32.mrf.mxu0
        %v1312 = vadd.f32 %v1103, %v1311
        %1313 = vmatmul.f32.gmra.mxu0 %v740
        %v1314 = vpop.f32.mrf.mxu0
        %v1315 = vadd.f32 %v1106, %v1314
        %1316 = vmatmul.f32.gmra.mxu0 %v746
        %v1317 = vpop.f32.mrf.mxu0
        %v1318 = vadd.f32 %v1109, %v1317
        %1319 = vmatmul.f32.gmra.mxu0 %v752
        %v1320 = vpop.f32.mrf.mxu0
        %v1321 = vadd.f32 %v1112, %v1320
        %1322 = vmatmul.f32.gmra.mxu0 %v758
        %v1323 = vpop.f32.mrf.mxu0
        %v1324 = vadd.f32 %v1115, %v1323
        %1325 = vmatmul.f32.gmra.mxu0 %v764
        %v1326 = vpop.f32.mrf.mxu0
        %v1327 = vadd.f32 %v1118, %v1326
        %1328 = vmatmul.f32.gmra.mxu0 %v770
        %v1329 = vpop.f32.mrf.mxu0
        %v1330 = vadd.f32 %v1121, %v1329
        %1331 = vmatmul.f32.gmra.mxu0 %v776
        %v1332 = vpop.f32.mrf.mxu0
        %v1333 = vadd.f32 %v1124, %v1332
        %1334 = vmatmul.f32.gmra.mxu0 %v782
        %v1335 = vpop.f32.mrf.mxu0
        %v1336 = vadd.f32 %v1127, %v1335
        %1337 = vmatmul.f32.gmra.mxu0 %v788
        %v1338 = vpop.f32.mrf.mxu0
        %v1339 = vadd.f32 %v1130, %v1338
        %1340 = vmatmul.f32.gmra.mxu0 %v794
        %v1341 = vpop.f32.mrf.mxu0
        %v1342 = vadd.f32 %v1133, %v1341
        %1343 = vmatmul.f32.gmra.mxu0 %v800
        %v1344 = vpop.f32.mrf.mxu0
        %v1345 = vadd.f32 %v1136, %v1344
        %1346 = vmatmul.f32.gmra.mxu0 %v806
        %v1347 = vpop.f32.mrf.mxu0
        %v1348 = vadd.f32 %v1139, %v1347
        %1349 = vmatmul.f32.gmra.mxu0 %v812
        %v1350 = vpop.f32.mrf.mxu0
        %v1351 = vadd.f32 %v1142, %v1350
        %1352 = vmatmul.f32.gmra.mxu0 %v818
        %v1353 = vpop.f32.mrf.mxu0
        %v1354 = vadd.f32 %v1145, %v1353
        %1355 = vmatmul.f32.gmra.mxu0 %v824
        %v1356 = vpop.f32.mrf.mxu0
        %v1357 = vadd.f32 %v1148, %v1356
        %1358 = vmatmul.f32.gmra.mxu0 %v830
        %v1359 = vpop.f32.mrf.mxu0
        %v1360 = vadd.f32 %v1151, %v1359
        %1361 = vmatmul.f32.gmra.mxu0 %v836
        %v1362 = vpop.f32.mrf.mxu0
        %v1363 = vadd.f32 %v1154, %v1362
        %1364 = vmatmul.f32.gmra.mxu0 %v842
        %v1365 = vpop.f32.mrf.mxu0
        %v1366 = vadd.f32 %v1157, %v1365
        %1367 = vmatmul.f32.gmra.mxu0 %v848
        %v1368 = vpop.f32.mrf.mxu0
        %v1369 = vadd.f32 %v1160, %v1368
        %1370 = vdwg.mxu0
        %1371 = vmatpush.msra.mxu0 %v900
        %1372 = vmatpush.msra.mxu0 %v899
        %1373 = vmatpush.msra.mxu0 %v898
        %1374 = vmatpush.msra.mxu0 %v897
        %1375 = vmatpush.msra.mxu0 %v896
        %1376 = vmatpush.msra.mxu0 %v895
        %1377 = vmatpush.msra.mxu0 %v894
        %1378 = vmatpush.msra.mxu0 %v893
        %1379 = vmatpush.msra.mxu0 %v892
        %1380 = vmatpush.msra.mxu0 %v891
        %1381 = vmatpush.msra.mxu0 %v890
        %1382 = vmatpush.msra.mxu0 %v889
        %1383 = vmatpush.msra.mxu0 %v888
        %1384 = vmatpush.msra.mxu0 %v887
        %1385 = vmatpush.msra.mxu0 %v886
        %1386 = vmatpush.msra.mxu0 %v885
        %1387 = vmatmul.f32.gmra.mxu0 %v471
        %v1388 = vpop.f32.mrf.mxu0
        %v1389 = vadd.f32 %v1180, %v1388
        %1390 = vmatmul.f32.gmra.mxu0 %v477
        %v1391 = vpop.f32.mrf.mxu0
        %v1392 = vadd.f32 %v1183, %v1391
        %1393 = vmatmul.f32.gmra.mxu0 %v483
        %v1394 = vpop.f32.mrf.mxu0
        %v1395 = vadd.f32 %v1186, %v1394
        %1396 = vmatmul.f32.gmra.mxu0 %v489
        %v1397 = vpop.f32.mrf.mxu0
        %v1398 = vadd.f32 %v1189, %v1397
        %1399 = vmatmul.f32.gmra.mxu0 %v495
        %v1400 = vpop.f32.mrf.mxu0
        %v1401 = vadd.f32 %v1192, %v1400
        %1402 = vmatmul.f32.gmra.mxu0 %v501
        %v1403 = vpop.f32.mrf.mxu0
        %v1404 = vadd.f32 %v1195, %v1403
        %1405 = vmatmul.f32.gmra.mxu0 %v507
        %v1406 = vpop.f32.mrf.mxu0
        %v1407 = vadd.f32 %v1198, %v1406
        %1408 = vmatmul.f32.gmra.mxu0 %v513
        %v1409 = vpop.f32.mrf.mxu0
        %v1410 = vadd.f32 %v1201, %v1409
        %1411 = vmatmul.f32.gmra.mxu0 %v519
        %v1412 = vpop.f32.mrf.mxu0
        %v1413 = vadd.f32 %v1204, %v1412
        %1414 = vmatmul.f32.gmra.mxu0 %v525
        %v1415 = vpop.f32.mrf.mxu0
        %v1416 = vadd.f32 %v1207, %v1415
        %1417 = vmatmul.f32.gmra.mxu0 %v531
        %v1418 = vpop.f32.mrf.mxu0
        %v1419 = vadd.f32 %v1210, %v1418
        %1420 = vmatmul.f32.gmra.mxu0 %v537
        %v1421 = vpop.f32.mrf.mxu0
        %v1422 = vadd.f32 %v1213, %v1421
        %1423 = vmatmul.f32.gmra.mxu0 %v543
        %v1424 = vpop.f32.mrf.mxu0
        %v1425 = vadd.f32 %v1216, %v1424
        %1426 = vmatmul.f32.gmra.mxu0 %v549
        %v1427 = vpop.f32.mrf.mxu0
        %v1428 = vadd.f32 %v1219, %v1427
        %1429 = vmatmul.f32.gmra.mxu0 %v555
        %v1430 = vpop.f32.mrf.mxu0
        %v1431 = vadd.f32 %v1222, %v1430
        %1432 = vmatmul.f32.gmra.mxu0 %v561
        %v1433 = vpop.f32.mrf.mxu0
        %v1434 = vadd.f32 %v1225, %v1433
        %1435 = vmatmul.f32.gmra.mxu0 %v567
        %v1436 = vpop.f32.mrf.mxu0
        %v1437 = vadd.f32 %v1228, %v1436
        %1438 = vmatmul.f32.gmra.mxu0 %v573
        %v1439 = vpop.f32.mrf.mxu0
        %v1440 = vadd.f32 %v1231, %v1439
        %1441 = vmatmul.f32.gmra.mxu0 %v579
        %v1442 = vpop.f32.mrf.mxu0
        %v1443 = vadd.f32 %v1234, %v1442
        %1444 = vmatmul.f32.gmra.mxu0 %v585
        %v1445 = vpop.f32.mrf.mxu0
        %v1446 = vadd.f32 %v1237, %v1445
        %1447 = vmatmul.f32.gmra.mxu0 %v591
        %v1448 = vpop.f32.mrf.mxu0
        %v1449 = vadd.f32 %v1240, %v1448
        %1450 = vmatmul.f32.gmra.mxu0 %v597
        %v1451 = vpop.f32.mrf.mxu0
        %v1452 = vadd.f32 %v1243, %v1451
        %1453 = vmatmul.f32.gmra.mxu0 %v603
        %v1454 = vpop.f32.mrf.mxu0
        %v1455 = vadd.f32 %v1246, %v1454
        %1456 = vmatmul.f32.gmra.mxu0 %v609
        %v1457 = vpop.f32.mrf.mxu0
        %v1458 = vadd.f32 %v1249, %v1457
        %1459 = vmatmul.f32.gmra.mxu0 %v615
        %v1460 = vpop.f32.mrf.mxu0
        %v1461 = vadd.f32 %v1252, %v1460
        %1462 = vmatmul.f32.gmra.mxu0 %v621
        %v1463 = vpop.f32.mrf.mxu0
        %v1464 = vadd.f32 %v1255, %v1463
        %1465 = vmatmul.f32.gmra.mxu0 %v627
        %v1466 = vpop.f32.mrf.mxu0
        %v1467 = vadd.f32 %v1258, %v1466
        %1468 = vmatmul.f32.gmra.mxu0 %v633
        %v1469 = vpop.f32.mrf.mxu0
        %v1470 = vadd.f32 %v1261, %v1469
        %1471 = vmatmul.f32.gmra.mxu0 %v639
        %v1472 = vpop.f32.mrf.mxu0
        %v1473 = vadd.f32 %v1264, %v1472
        %1474 = vmatmul.f32.gmra.mxu0 %v645
        %v1475 = vpop.f32.mrf.mxu0
        %v1476 = vadd.f32 %v1267, %v1475
        %1477 = vmatmul.f32.gmra.mxu0 %v651
        %v1478 = vpop.f32.mrf.mxu0
        %v1479 = vadd.f32 %v1270, %v1478
        %1480 = vmatmul.f32.gmra.mxu0 %v657
        %v1481 = vpop.f32.mrf.mxu0
        %v1482 = vadd.f32 %v1273, %v1481
        %1483 = vmatmul.f32.gmra.mxu0 %v663
        %v1484 = vpop.f32.mrf.mxu0
        %v1485 = vadd.f32 %v1276, %v1484
        %1486 = vmatmul.f32.gmra.mxu0 %v669
        %v1487 = vpop.f32.mrf.mxu0
        %v1488 = vadd.f32 %v1279, %v1487
        %1489 = vmatmul.f32.gmra.mxu0 %v675
        %v1490 = vpop.f32.mrf.mxu0
        %v1491 = vadd.f32 %v1282, %v1490
        %1492 = vmatmul.f32.gmra.mxu0 %v681
        %v1493 = vpop.f32.mrf.mxu0
        %v1494 = vadd.f32 %v1285, %v1493
        %1495 = vmatmul.f32.gmra.mxu0 %v687
        %v1496 = vpop.f32.mrf.mxu0
        %v1497 = vadd.f32 %v1288, %v1496
        %1498 = vmatmul.f32.gmra.mxu0 %v693
        %v1499 = vpop.f32.mrf.mxu0
        %v1500 = vadd.f32 %v1291, %v1499
        %1501 = vmatmul.f32.gmra.mxu0 %v699
        %v1502 = vpop.f32.mrf.mxu0
        %v1503 = vadd.f32 %v1294, %v1502
        %1504 = vmatmul.f32.gmra.mxu0 %v705
        %v1505 = vpop.f32.mrf.mxu0
        %v1506 = vadd.f32 %v1297, %v1505
        %1507 = vmatmul.f32.gmra.mxu0 %v711
        %v1508 = vpop.f32.mrf.mxu0
        %v1509 = vadd.f32 %v1300, %v1508
        %1510 = vmatmul.f32.gmra.mxu0 %v717
        %v1511 = vpop.f32.mrf.mxu0
        %v1512 = vadd.f32 %v1303, %v1511
        %1513 = vmatmul.f32.gmra.mxu0 %v723
        %v1514 = vpop.f32.mrf.mxu0
        %v1515 = vadd.f32 %v1306, %v1514
        %1516 = vmatmul.f32.gmra.mxu0 %v729
        %v1517 = vpop.f32.mrf.mxu0
        %v1518 = vadd.f32 %v1309, %v1517
        %1519 = vmatmul.f32.gmra.mxu0 %v735
        %v1520 = vpop.f32.mrf.mxu0
        %v1521 = vadd.f32 %v1312, %v1520
        %1522 = vmatmul.f32.gmra.mxu0 %v741
        %v1523 = vpop.f32.mrf.mxu0
        %v1524 = vadd.f32 %v1315, %v1523
        %1525 = vmatmul.f32.gmra.mxu0 %v747
        %v1526 = vpop.f32.mrf.mxu0
        %v1527 = vadd.f32 %v1318, %v1526
        %1528 = vmatmul.f32.gmra.mxu0 %v753
        %v1529 = vpop.f32.mrf.mxu0
        %v1530 = vadd.f32 %v1321, %v1529
        %1531 = vmatmul.f32.gmra.mxu0 %v759
        %v1532 = vpop.f32.mrf.mxu0
        %v1533 = vadd.f32 %v1324, %v1532
        %1534 = vmatmul.f32.gmra.mxu0 %v765
        %v1535 = vpop.f32.mrf.mxu0
        %v1536 = vadd.f32 %v1327, %v1535
        %1537 = vmatmul.f32.gmra.mxu0 %v771
        %v1538 = vpop.f32.mrf.mxu0
        %v1539 = vadd.f32 %v1330, %v1538
        %1540 = vmatmul.f32.gmra.mxu0 %v777
        %v1541 = vpop.f32.mrf.mxu0
        %v1542 = vadd.f32 %v1333, %v1541
        %1543 = vmatmul.f32.gmra.mxu0 %v783
        %v1544 = vpop.f32.mrf.mxu0
        %v1545 = vadd.f32 %v1336, %v1544
        %1546 = vmatmul.f32.gmra.mxu0 %v789
        %v1547 = vpop.f32.mrf.mxu0
        %v1548 = vadd.f32 %v1339, %v1547
        %1549 = vmatmul.f32.gmra.mxu0 %v795
        %v1550 = vpop.f32.mrf.mxu0
        %v1551 = vadd.f32 %v1342, %v1550
        %1552 = vmatmul.f32.gmra.mxu0 %v801
        %v1553 = vpop.f32.mrf.mxu0
        %v1554 = vadd.f32 %v1345, %v1553
        %1555 = vmatmul.f32.gmra.mxu0 %v807
        %v1556 = vpop.f32.mrf.mxu0
        %v1557 = vadd.f32 %v1348, %v1556
        %1558 = vmatmul.f32.gmra.mxu0 %v813
        %v1559 = vpop.f32.mrf.mxu0
        %v1560 = vadd.f32 %v1351, %v1559
        %1561 = vmatmul.f32.gmra.mxu0 %v819
        %v1562 = vpop.f32.mrf.mxu0
        %v1563 = vadd.f32 %v1354, %v1562
        %1564 = vmatmul.f32.gmra.mxu0 %v825
        %v1565 = vpop.f32.mrf.mxu0
        %v1566 = vadd.f32 %v1357, %v1565
        %1567 = vmatmul.f32.gmra.mxu0 %v831
        %v1568 = vpop.f32.mrf.mxu0
        %v1569 = vadd.f32 %v1360, %v1568
        %1570 = vmatmul.f32.gmra.mxu0 %v837
        %v1571 = vpop.f32.mrf.mxu0
        %v1572 = vadd.f32 %v1363, %v1571
        %1573 = vmatmul.f32.gmra.mxu0 %v843
        %v1574 = vpop.f32.mrf.mxu0
        %v1575 = vadd.f32 %v1366, %v1574
        %1576 = vmatmul.f32.gmra.mxu0 %v849
        %v1577 = vpop.f32.mrf.mxu0
        %v1578 = vadd.f32 %v1369, %v1577
        %1579 = vdwg.mxu0
        %1580 = vmatpush.msra.mxu0 %v916
        %1581 = vmatpush.msra.mxu0 %v915
        %1582 = vmatpush.msra.mxu0 %v914
        %1583 = vmatpush.msra.mxu0 %v913
        %1584 = vmatpush.msra.mxu0 %v912
        %1585 = vmatpush.msra.mxu0 %v911
        %1586 = vmatpush.msra.mxu0 %v910
        %1587 = vmatpush.msra.mxu0 %v909
        %1588 = vmatpush.msra.mxu0 %v908
        %1589 = vmatpush.msra.mxu0 %v907
        %1590 = vmatpush.msra.mxu0 %v906
        %1591 = vmatpush.msra.mxu0 %v905
        %1592 = vmatpush.msra.mxu0 %v904
        %1593 = vmatpush.msra.mxu0 %v903
        %1594 = vmatpush.msra.mxu0 %v902
        %1595 = vmatpush.msra.mxu0 %v901
        %1596 = vmatmul.f32.gmra.mxu0 %v472
        %v1597 = vpop.f32.mrf.mxu0
        %v1598 = vadd.f32 %v1389, %v1597
        %1599 = vmatmul.f32.gmra.mxu0 %v478
        %v1600 = vpop.f32.mrf.mxu0
        %v1601 = vadd.f32 %v1392, %v1600
        %1602 = vmatmul.f32.gmra.mxu0 %v484
        %v1603 = vpop.f32.mrf.mxu0
        %v1604 = vadd.f32 %v1395, %v1603
        %1605 = vmatmul.f32.gmra.mxu0 %v490
        %v1606 = vpop.f32.mrf.mxu0
        %v1607 = vadd.f32 %v1398, %v1606
        %1608 = vmatmul.f32.gmra.mxu0 %v496
        %v1609 = vpop.f32.mrf.mxu0
        %v1610 = vadd.f32 %v1401, %v1609
        %1611 = vmatmul.f32.gmra.mxu0 %v502
        %v1612 = vpop.f32.mrf.mxu0
        %v1613 = vadd.f32 %v1404, %v1612
        %1614 = vmatmul.f32.gmra.mxu0 %v508
        %v1615 = vpop.f32.mrf.mxu0
        %v1616 = vadd.f32 %v1407, %v1615
        %1617 = vmatmul.f32.gmra.mxu0 %v514
        %v1618 = vpop.f32.mrf.mxu0
        %v1619 = vadd.f32 %v1410, %v1618
        %1620 = vmatmul.f32.gmra.mxu0 %v520
        %v1621 = vpop.f32.mrf.mxu0
        %v1622 = vadd.f32 %v1413, %v1621
        %1623 = vmatmul.f32.gmra.mxu0 %v526
        %v1624 = vpop.f32.mrf.mxu0
        %v1625 = vadd.f32 %v1416, %v1624
        %1626 = vmatmul.f32.gmra.mxu0 %v532
        %v1627 = vpop.f32.mrf.mxu0
        %v1628 = vadd.f32 %v1419, %v1627
        %1629 = vmatmul.f32.gmra.mxu0 %v538
        %v1630 = vpop.f32.mrf.mxu0
        %v1631 = vadd.f32 %v1422, %v1630
        %1632 = vmatmul.f32.gmra.mxu0 %v544
        %v1633 = vpop.f32.mrf.mxu0
        %v1634 = vadd.f32 %v1425, %v1633
        %1635 = vmatmul.f32.gmra.mxu0 %v550
        %v1636 = vpop.f32.mrf.mxu0
        %v1637 = vadd.f32 %v1428, %v1636
        %1638 = vmatmul.f32.gmra.mxu0 %v556
        %v1639 = vpop.f32.mrf.mxu0
        %v1640 = vadd.f32 %v1431, %v1639
        %1641 = vmatmul.f32.gmra.mxu0 %v562
        %v1642 = vpop.f32.mrf.mxu0
        %v1643 = vadd.f32 %v1434, %v1642
        %1644 = vmatmul.f32.gmra.mxu0 %v568
        %v1645 = vpop.f32.mrf.mxu0
        %v1646 = vadd.f32 %v1437, %v1645
        %1647 = vmatmul.f32.gmra.mxu0 %v574
        %v1648 = vpop.f32.mrf.mxu0
        %v1649 = vadd.f32 %v1440, %v1648
        %1650 = vmatmul.f32.gmra.mxu0 %v580
        %v1651 = vpop.f32.mrf.mxu0
        %v1652 = vadd.f32 %v1443, %v1651
        %1653 = vmatmul.f32.gmra.mxu0 %v586
        %v1654 = vpop.f32.mrf.mxu0
        %v1655 = vadd.f32 %v1446, %v1654
        %1656 = vmatmul.f32.gmra.mxu0 %v592
        %v1657 = vpop.f32.mrf.mxu0
        %v1658 = vadd.f32 %v1449, %v1657
        %1659 = vmatmul.f32.gmra.mxu0 %v598
        %v1660 = vpop.f32.mrf.mxu0
        %v1661 = vadd.f32 %v1452, %v1660
        %1662 = vmatmul.f32.gmra.mxu0 %v604
        %v1663 = vpop.f32.mrf.mxu0
        %v1664 = vadd.f32 %v1455, %v1663
        %1665 = vmatmul.f32.gmra.mxu0 %v610
        %v1666 = vpop.f32.mrf.mxu0
        %v1667 = vadd.f32 %v1458, %v1666
        %1668 = vmatmul.f32.gmra.mxu0 %v616
        %v1669 = vpop.f32.mrf.mxu0
        %v1670 = vadd.f32 %v1461, %v1669
        %1671 = vmatmul.f32.gmra.mxu0 %v622
        %v1672 = vpop.f32.mrf.mxu0
        %v1673 = vadd.f32 %v1464, %v1672
        %1674 = vmatmul.f32.gmra.mxu0 %v628
        %v1675 = vpop.f32.mrf.mxu0
        %v1676 = vadd.f32 %v1467, %v1675
        %1677 = vmatmul.f32.gmra.mxu0 %v634
        %v1678 = vpop.f32.mrf.mxu0
        %v1679 = vadd.f32 %v1470, %v1678
        %1680 = vmatmul.f32.gmra.mxu0 %v640
        %v1681 = vpop.f32.mrf.mxu0
        %v1682 = vadd.f32 %v1473, %v1681
        %1683 = vmatmul.f32.gmra.mxu0 %v646
        %v1684 = vpop.f32.mrf.mxu0
        %v1685 = vadd.f32 %v1476, %v1684
        %1686 = vmatmul.f32.gmra.mxu0 %v652
        %v1687 = vpop.f32.mrf.mxu0
        %v1688 = vadd.f32 %v1479, %v1687
        %1689 = vmatmul.f32.gmra.mxu0 %v658
        %v1690 = vpop.f32.mrf.mxu0
        %v1691 = vadd.f32 %v1482, %v1690
        %1692 = vmatmul.f32.gmra.mxu0 %v664
        %v1693 = vpop.f32.mrf.mxu0
        %v1694 = vadd.f32 %v1485, %v1693
        %1695 = vmatmul.f32.gmra.mxu0 %v670
        %v1696 = vpop.f32.mrf.mxu0
        %v1697 = vadd.f32 %v1488, %v1696
        %1698 = vmatmul.f32.gmra.mxu0 %v676
        %v1699 = vpop.f32.mrf.mxu0
        %v1700 = vadd.f32 %v1491, %v1699
        %1701 = vmatmul.f32.gmra.mxu0 %v682
        %v1702 = vpop.f32.mrf.mxu0
        %v1703 = vadd.f32 %v1494, %v1702
        %1704 = vmatmul.f32.gmra.mxu0 %v688
        %v1705 = vpop.f32.mrf.mxu0
        %v1706 = vadd.f32 %v1497, %v1705
        %1707 = vmatmul.f32.gmra.mxu0 %v694
        %v1708 = vpop.f32.mrf.mxu0
        %v1709 = vadd.f32 %v1500, %v1708
        %1710 = vmatmul.f32.gmra.mxu0 %v700
        %v1711 = vpop.f32.mrf.mxu0
        %v1712 = vadd.f32 %v1503, %v1711
        %1713 = vmatmul.f32.gmra.mxu0 %v706
        %v1714 = vpop.f32.mrf.mxu0
        %v1715 = vadd.f32 %v1506, %v1714
        %1716 = vmatmul.f32.gmra.mxu0 %v712
        %v1717 = vpop.f32.mrf.mxu0
        %v1718 = vadd.f32 %v1509, %v1717
        %1719 = vmatmul.f32.gmra.mxu0 %v718
        %v1720 = vpop.f32.mrf.mxu0
        %v1721 = vadd.f32 %v1512, %v1720
        %1722 = vmatmul.f32.gmra.mxu0 %v724
        %v1723 = vpop.f32.mrf.mxu0
        %v1724 = vadd.f32 %v1515, %v1723
        %1725 = vmatmul.f32.gmra.mxu0 %v730
        %v1726 = vpop.f32.mrf.mxu0
        %v1727 = vadd.f32 %v1518, %v1726
        %1728 = vmatmul.f32.gmra.mxu0 %v736
        %v1729 = vpop.f32.mrf.mxu0
        %v1730 = vadd.f32 %v1521, %v1729
        %1731 = vmatmul.f32.gmra.mxu0 %v742
        %v1732 = vpop.f32.mrf.mxu0
        %v1733 = vadd.f32 %v1524, %v1732
        %1734 = vmatmul.f32.gmra.mxu0 %v748
        %v1735 = vpop.f32.mrf.mxu0
        %v1736 = vadd.f32 %v1527, %v1735
        %1737 = vmatmul.f32.gmra.mxu0 %v754
        %v1738 = vpop.f32.mrf.mxu0
        %v1739 = vadd.f32 %v1530, %v1738
        %1740 = vmatmul.f32.gmra.mxu0 %v760
        %v1741 = vpop.f32.mrf.mxu0
        %v1742 = vadd.f32 %v1533, %v1741
        %1743 = vmatmul.f32.gmra.mxu0 %v766
        %v1744 = vpop.f32.mrf.mxu0
        %v1745 = vadd.f32 %v1536, %v1744
        %1746 = vmatmul.f32.gmra.mxu0 %v772
        %v1747 = vpop.f32.mrf.mxu0
        %v1748 = vadd.f32 %v1539, %v1747
        %1749 = vmatmul.f32.gmra.mxu0 %v778
        %v1750 = vpop.f32.mrf.mxu0
        %v1751 = vadd.f32 %v1542, %v1750
        %1752 = vmatmul.f32.gmra.mxu0 %v784
        %v1753 = vpop.f32.mrf.mxu0
        %v1754 = vadd.f32 %v1545, %v1753
        %1755 = vmatmul.f32.gmra.mxu0 %v790
        %v1756 = vpop.f32.mrf.mxu0
        %v1757 = vadd.f32 %v1548, %v1756
        %1758 = vmatmul.f32.gmra.mxu0 %v796
        %v1759 = vpop.f32.mrf.mxu0
        %v1760 = vadd.f32 %v1551, %v1759
        %1761 = vmatmul.f32.gmra.mxu0 %v802
        %v1762 = vpop.f32.mrf.mxu0
        %v1763 = vadd.f32 %v1554, %v1762
        %1764 = vmatmul.f32.gmra.mxu0 %v808
        %v1765 = vpop.f32.mrf.mxu0
        %v1766 = vadd.f32 %v1557, %v1765
        %1767 = vmatmul.f32.gmra.mxu0 %v814
        %v1768 = vpop.f32.mrf.mxu0
        %v1769 = vadd.f32 %v1560, %v1768
        %1770 = vmatmul.f32.gmra.mxu0 %v820
        %v1771 = vpop.f32.mrf.mxu0
        %v1772 = vadd.f32 %v1563, %v1771
        %1773 = vmatmul.f32.gmra.mxu0 %v826
        %v1774 = vpop.f32.mrf.mxu0
        %v1775 = vadd.f32 %v1566, %v1774
        %1776 = vmatmul.f32.gmra.mxu0 %v832
        %v1777 = vpop.f32.mrf.mxu0
        %v1778 = vadd.f32 %v1569, %v1777
        %1779 = vmatmul.f32.gmra.mxu0 %v838
        %v1780 = vpop.f32.mrf.mxu0
        %v1781 = vadd.f32 %v1572, %v1780
        %1782 = vmatmul.f32.gmra.mxu0 %v844
        %v1783 = vpop.f32.mrf.mxu0
        %v1784 = vadd.f32 %v1575, %v1783
        %1785 = vmatmul.f32.gmra.mxu0 %v850
        %v1786 = vpop.f32.mrf.mxu0
        %v1787 = vadd.f32 %v1578, %v1786
        %1788 = vdwg.mxu0
        %1789 = vmatpush.msra.mxu0 %v932
        %1790 = vmatpush.msra.mxu0 %v931
        %1791 = vmatpush.msra.mxu0 %v930
        %1792 = vmatpush.msra.mxu0 %v929
        %1793 = vmatpush.msra.mxu0 %v928
        %1794 = vmatpush.msra.mxu0 %v927
        %1795 = vmatpush.msra.mxu0 %v926
        %1796 = vmatpush.msra.mxu0 %v925
        %1797 = vmatpush.msra.mxu0 %v924
        %1798 = vmatpush.msra.mxu0 %v923
        %1799 = vmatpush.msra.mxu0 %v922
        %1800 = vmatpush.msra.mxu0 %v921
        %1801 = vmatpush.msra.mxu0 %v920
        %1802 = vmatpush.msra.mxu0 %v919
        %1803 = vmatpush.msra.mxu0 %v918
        %1804 = vmatpush.msra.mxu0 %v917
        %1805 = vmatmul.f32.gmra.mxu0 %v473
        %v1806 = vpop.f32.mrf.mxu0
        %v1807 = vadd.f32 %v1598, %v1806
        %1808 = vmatmul.f32.gmra.mxu0 %v479
        %v1809 = vpop.f32.mrf.mxu0
        %v1810 = vadd.f32 %v1601, %v1809
        %1811 = vmatmul.f32.gmra.mxu0 %v485
        %v1812 = vpop.f32.mrf.mxu0
        %v1813 = vadd.f32 %v1604, %v1812
        %1814 = vmatmul.f32.gmra.mxu0 %v491
        %v1815 = vpop.f32.mrf.mxu0
        %v1816 = vadd.f32 %v1607, %v1815
        %1817 = vmatmul.f32.gmra.mxu0 %v497
        %v1818 = vpop.f32.mrf.mxu0
        %v1819 = vadd.f32 %v1610, %v1818
        %1820 = vmatmul.f32.gmra.mxu0 %v503
        %v1821 = vpop.f32.mrf.mxu0
        %v1822 = vadd.f32 %v1613, %v1821
        %1823 = vmatmul.f32.gmra.mxu0 %v509
        %v1824 = vpop.f32.mrf.mxu0
        %v1825 = vadd.f32 %v1616, %v1824
        %1826 = vmatmul.f32.gmra.mxu0 %v515
        %v1827 = vpop.f32.mrf.mxu0
        %v1828 = vadd.f32 %v1619, %v1827
        %1829 = vmatmul.f32.gmra.mxu0 %v521
        %v1830 = vpop.f32.mrf.mxu0
        %v1831 = vadd.f32 %v1622, %v1830
        %1832 = vmatmul.f32.gmra.mxu0 %v527
        %v1833 = vpop.f32.mrf.mxu0
        %v1834 = vadd.f32 %v1625, %v1833
        %1835 = vmatmul.f32.gmra.mxu0 %v533
        %v1836 = vpop.f32.mrf.mxu0
        %v1837 = vadd.f32 %v1628, %v1836
        %1838 = vmatmul.f32.gmra.mxu0 %v539
        %v1839 = vpop.f32.mrf.mxu0
        %v1840 = vadd.f32 %v1631, %v1839
        %1841 = vmatmul.f32.gmra.mxu0 %v545
        %v1842 = vpop.f32.mrf.mxu0
        %v1843 = vadd.f32 %v1634, %v1842
        %1844 = vmatmul.f32.gmra.mxu0 %v551
        %v1845 = vpop.f32.mrf.mxu0
        %v1846 = vadd.f32 %v1637, %v1845
        %1847 = vmatmul.f32.gmra.mxu0 %v557
        %v1848 = vpop.f32.mrf.mxu0
        %v1849 = vadd.f32 %v1640, %v1848
        %1850 = vmatmul.f32.gmra.mxu0 %v563
        %v1851 = vpop.f32.mrf.mxu0
        %v1852 = vadd.f32 %v1643, %v1851
        %1853 = vmatmul.f32.gmra.mxu0 %v569
        %v1854 = vpop.f32.mrf.mxu0
        %v1855 = vadd.f32 %v1646, %v1854
        %1856 = vmatmul.f32.gmra.mxu0 %v575
        %v1857 = vpop.f32.mrf.mxu0
        %v1858 = vadd.f32 %v1649, %v1857
        %1859 = vmatmul.f32.gmra.mxu0 %v581
        %v1860 = vpop.f32.mrf.mxu0
        %v1861 = vadd.f32 %v1652, %v1860
        %1862 = vmatmul.f32.gmra.mxu0 %v587
        %v1863 = vpop.f32.mrf.mxu0
        %v1864 = vadd.f32 %v1655, %v1863
        %1865 = vmatmul.f32.gmra.mxu0 %v593
        %v1866 = vpop.f32.mrf.mxu0
        %v1867 = vadd.f32 %v1658, %v1866
        %1868 = vmatmul.f32.gmra.mxu0 %v599
        %v1869 = vpop.f32.mrf.mxu0
        %v1870 = vadd.f32 %v1661, %v1869
        %1871 = vmatmul.f32.gmra.mxu0 %v605
        %v1872 = vpop.f32.mrf.mxu0
        %v1873 = vadd.f32 %v1664, %v1872
        %1874 = vmatmul.f32.gmra.mxu0 %v611
        %v1875 = vpop.f32.mrf.mxu0
        %v1876 = vadd.f32 %v1667, %v1875
        %1877 = vmatmul.f32.gmra.mxu0 %v617
        %v1878 = vpop.f32.mrf.mxu0
        %v1879 = vadd.f32 %v1670, %v1878
        %1880 = vmatmul.f32.gmra.mxu0 %v623
        %v1881 = vpop.f32.mrf.mxu0
        %v1882 = vadd.f32 %v1673, %v1881
        %1883 = vmatmul.f32.gmra.mxu0 %v629
        %v1884 = vpop.f32.mrf.mxu0
        %v1885 = vadd.f32 %v1676, %v1884
        %1886 = vmatmul.f32.gmra.mxu0 %v635
        %v1887 = vpop.f32.mrf.mxu0
        %v1888 = vadd.f32 %v1679, %v1887
        %1889 = vmatmul.f32.gmra.mxu0 %v641
        %v1890 = vpop.f32.mrf.mxu0
        %v1891 = vadd.f32 %v1682, %v1890
        %1892 = vmatmul.f32.gmra.mxu0 %v647
        %v1893 = vpop.f32.mrf.mxu0
        %v1894 = vadd.f32 %v1685, %v1893
        %1895 = vmatmul.f32.gmra.mxu0 %v653
        %v1896 = vpop.f32.mrf.mxu0
        %v1897 = vadd.f32 %v1688, %v1896
        %1898 = vmatmul.f32.gmra.mxu0 %v659
        %v1899 = vpop.f32.mrf.mxu0
        %v1900 = vadd.f32 %v1691, %v1899
        %1901 = vmatmul.f32.gmra.mxu0 %v665
        %v1902 = vpop.f32.mrf.mxu0
        %v1903 = vadd.f32 %v1694, %v1902
        %1904 = vmatmul.f32.gmra.mxu0 %v671
        %v1905 = vpop.f32.mrf.mxu0
        %v1906 = vadd.f32 %v1697, %v1905
        %1907 = vmatmul.f32.gmra.mxu0 %v677
        %v1908 = vpop.f32.mrf.mxu0
        %v1909 = vadd.f32 %v1700, %v1908
        %1910 = vmatmul.f32.gmra.mxu0 %v683
        %v1911 = vpop.f32.mrf.mxu0
        %v1912 = vadd.f32 %v1703, %v1911
        %1913 = vmatmul.f32.gmra.mxu0 %v689
        %v1914 = vpop.f32.mrf.mxu0
        %v1915 = vadd.f32 %v1706, %v1914
        %1916 = vmatmul.f32.gmra.mxu0 %v695
        %v1917 = vpop.f32.mrf.mxu0
        %v1918 = vadd.f32 %v1709, %v1917
        %1919 = vmatmul.f32.gmra.mxu0 %v701
        %v1920 = vpop.f32.mrf.mxu0
        %v1921 = vadd.f32 %v1712, %v1920
        %1922 = vmatmul.f32.gmra.mxu0 %v707
        %v1923 = vpop.f32.mrf.mxu0
        %v1924 = vadd.f32 %v1715, %v1923
        %1925 = vmatmul.f32.gmra.mxu0 %v713
        %v1926 = vpop.f32.mrf.mxu0
        %v1927 = vadd.f32 %v1718, %v1926
        %1928 = vmatmul.f32.gmra.mxu0 %v719
        %v1929 = vpop.f32.mrf.mxu0
        %v1930 = vadd.f32 %v1721, %v1929
        %1931 = vmatmul.f32.gmra.mxu0 %v725
        %v1932 = vpop.f32.mrf.mxu0
        %v1933 = vadd.f32 %v1724, %v1932
        %1934 = vmatmul.f32.gmra.mxu0 %v731
        %v1935 = vpop.f32.mrf.mxu0
        %v1936 = vadd.f32 %v1727, %v1935
        %1937 = vmatmul.f32.gmra.mxu0 %v737
        %v1938 = vpop.f32.mrf.mxu0
        %v1939 = vadd.f32 %v1730, %v1938
        %1940 = vmatmul.f32.gmra.mxu0 %v743
        %v1941 = vpop.f32.mrf.mxu0
        %v1942 = vadd.f32 %v1733, %v1941
        %1943 = vmatmul.f32.gmra.mxu0 %v749
        %v1944 = vpop.f32.mrf.mxu0
        %v1945 = vadd.f32 %v1736, %v1944
        %1946 = vmatmul.f32.gmra.mxu0 %v755
        %v1947 = vpop.f32.mrf.mxu0
        %v1948 = vadd.f32 %v1739, %v1947
        %1949 = vmatmul.f32.gmra.mxu0 %v761
        %v1950 = vpop.f32.mrf.mxu0
        %v1951 = vadd.f32 %v1742, %v1950
        %1952 = vmatmul.f32.gmra.mxu0 %v767
        %v1953 = vpop.f32.mrf.mxu0
        %v1954 = vadd.f32 %v1745, %v1953
        %1955 = vmatmul.f32.gmra.mxu0 %v773
        %v1956 = vpop.f32.mrf.mxu0
        %v1957 = vadd.f32 %v1748, %v1956
        %1958 = vmatmul.f32.gmra.mxu0 %v779
        %v1959 = vpop.f32.mrf.mxu0
        %v1960 = vadd.f32 %v1751, %v1959
        %1961 = vmatmul.f32.gmra.mxu0 %v785
        %v1962 = vpop.f32.mrf.mxu0
        %v1963 = vadd.f32 %v1754, %v1962
        %1964 = vmatmul.f32.gmra.mxu0 %v791
        %v1965 = vpop.f32.mrf.mxu0
        %v1966 = vadd.f32 %v1757, %v1965
        %1967 = vmatmul.f32.gmra.mxu0 %v797
        %v1968 = vpop.f32.mrf.mxu0
        %v1969 = vadd.f32 %v1760, %v1968
        %1970 = vmatmul.f32.gmra.mxu0 %v803
        %v1971 = vpop.f32.mrf.mxu0
        %v1972 = vadd.f32 %v1763, %v1971
        %1973 = vmatmul.f32.gmra.mxu0 %v809
        %v1974 = vpop.f32.mrf.mxu0
        %v1975 = vadd.f32 %v1766, %v1974
        %1976 = vmatmul.f32.gmra.mxu0 %v815
        %v1977 = vpop.f32.mrf.mxu0
        %v1978 = vadd.f32 %v1769, %v1977
        %1979 = vmatmul.f32.gmra.mxu0 %v821
        %v1980 = vpop.f32.mrf.mxu0
        %v1981 = vadd.f32 %v1772, %v1980
        %1982 = vmatmul.f32.gmra.mxu0 %v827
        %v1983 = vpop.f32.mrf.mxu0
        %v1984 = vadd.f32 %v1775, %v1983
        %1985 = vmatmul.f32.gmra.mxu0 %v833
        %v1986 = vpop.f32.mrf.mxu0
        %v1987 = vadd.f32 %v1778, %v1986
        %1988 = vmatmul.f32.gmra.mxu0 %v839
        %v1989 = vpop.f32.mrf.mxu0
        %v1990 = vadd.f32 %v1781, %v1989
        %1991 = vmatmul.f32.gmra.mxu0 %v845
        %v1992 = vpop.f32.mrf.mxu0
        %v1993 = vadd.f32 %v1784, %v1992
        %1994 = vmatmul.f32.gmra.mxu0 %v851
        %v1995 = vpop.f32.mrf.mxu0
        %v1996 = vadd.f32 %v1787, %v1995
        %1997 = vdwg.mxu0
        %1998 = vmatpush.msra.mxu0 %v948
        %1999 = vmatpush.msra.mxu0 %v947
        %2000 = vmatpush.msra.mxu0 %v946
        %2001 = vmatpush.msra.mxu0 %v945
        %2002 = vmatpush.msra.mxu0 %v944
        %2003 = vmatpush.msra.mxu0 %v943
        %2004 = vmatpush.msra.mxu0 %v942
        %2005 = vmatpush.msra.mxu0 %v941
        %2006 = vmatpush.msra.mxu0 %v940
        %2007 = vmatpush.msra.mxu0 %v939
        %2008 = vmatpush.msra.mxu0 %v938
        %2009 = vmatpush.msra.mxu0 %v937
        %2010 = vmatpush.msra.mxu0 %v936
        %2011 = vmatpush.msra.mxu0 %v935
        %2012 = vmatpush.msra.mxu0 %v934
        %2013 = vmatpush.msra.mxu0 %v933
        %2014 = vmatmul.f32.gmra.mxu0 %v474
        %v2015 = vpop.f32.mrf.mxu0
        %v2016 = vadd.f32 %v1807, %v2015
        %2017 = vmatmul.f32.gmra.mxu0 %v480
        %v2018 = vpop.f32.mrf.mxu0
        %v2019 = vadd.f32 %v1810, %v2018
        %2020 = vmatmul.f32.gmra.mxu0 %v486
        %v2021 = vpop.f32.mrf.mxu0
        %v2022 = vadd.f32 %v1813, %v2021
        %2023 = vmatmul.f32.gmra.mxu0 %v492
        %v2024 = vpop.f32.mrf.mxu0
        %v2025 = vadd.f32 %v1816, %v2024
        %2026 = vmatmul.f32.gmra.mxu0 %v498
        %v2027 = vpop.f32.mrf.mxu0
        %v2028 = vadd.f32 %v1819, %v2027
        %2029 = vmatmul.f32.gmra.mxu0 %v504
        %v2030 = vpop.f32.mrf.mxu0
        %v2031 = vadd.f32 %v1822, %v2030
        %2032 = vmatmul.f32.gmra.mxu0 %v510
        %v2033 = vpop.f32.mrf.mxu0
        %v2034 = vadd.f32 %v1825, %v2033
        %2035 = vmatmul.f32.gmra.mxu0 %v516
        %v2036 = vpop.f32.mrf.mxu0
        %v2037 = vadd.f32 %v1828, %v2036
        %2038 = vmatmul.f32.gmra.mxu0 %v522
        %v2039 = vpop.f32.mrf.mxu0
        %v2040 = vadd.f32 %v1831, %v2039
        %2041 = vmatmul.f32.gmra.mxu0 %v528
        %v2042 = vpop.f32.mrf.mxu0
        %v2043 = vadd.f32 %v1834, %v2042
        %2044 = vmatmul.f32.gmra.mxu0 %v534
        %v2045 = vpop.f32.mrf.mxu0
        %v2046 = vadd.f32 %v1837, %v2045
        %2047 = vmatmul.f32.gmra.mxu0 %v540
        %v2048 = vpop.f32.mrf.mxu0
        %v2049 = vadd.f32 %v1840, %v2048
        %2050 = vmatmul.f32.gmra.mxu0 %v546
        %v2051 = vpop.f32.mrf.mxu0
        %v2052 = vadd.f32 %v1843, %v2051
        %2053 = vmatmul.f32.gmra.mxu0 %v552
        %v2054 = vpop.f32.mrf.mxu0
        %v2055 = vadd.f32 %v1846, %v2054
        %2056 = vmatmul.f32.gmra.mxu0 %v558
        %v2057 = vpop.f32.mrf.mxu0
        %v2058 = vadd.f32 %v1849, %v2057
        %2059 = vmatmul.f32.gmra.mxu0 %v564
        %v2060 = vpop.f32.mrf.mxu0
        %v2061 = vadd.f32 %v1852, %v2060
        %2062 = vmatmul.f32.gmra.mxu0 %v570
        %v2063 = vpop.f32.mrf.mxu0
        %v2064 = vadd.f32 %v1855, %v2063
        %2065 = vmatmul.f32.gmra.mxu0 %v576
        %v2066 = vpop.f32.mrf.mxu0
        %v2067 = vadd.f32 %v1858, %v2066
        %2068 = vmatmul.f32.gmra.mxu0 %v582
        %v2069 = vpop.f32.mrf.mxu0
        %v2070 = vadd.f32 %v1861, %v2069
        %2071 = vmatmul.f32.gmra.mxu0 %v588
        %v2072 = vpop.f32.mrf.mxu0
        %v2073 = vadd.f32 %v1864, %v2072
        %2074 = vmatmul.f32.gmra.mxu0 %v594
        %v2075 = vpop.f32.mrf.mxu0
        %v2076 = vadd.f32 %v1867, %v2075
        %2077 = vmatmul.f32.gmra.mxu0 %v600
        %v2078 = vpop.f32.mrf.mxu0
        %v2079 = vadd.f32 %v1870, %v2078
        %2080 = vmatmul.f32.gmra.mxu0 %v606
        %v2081 = vpop.f32.mrf.mxu0
        %v2082 = vadd.f32 %v1873, %v2081
        %2083 = vmatmul.f32.gmra.mxu0 %v612
        %v2084 = vpop.f32.mrf.mxu0
        %v2085 = vadd.f32 %v1876, %v2084
        %2086 = vmatmul.f32.gmra.mxu0 %v618
        %v2087 = vpop.f32.mrf.mxu0
        %v2088 = vadd.f32 %v1879, %v2087
        %2089 = vmatmul.f32.gmra.mxu0 %v624
        %v2090 = vpop.f32.mrf.mxu0
        %v2091 = vadd.f32 %v1882, %v2090
        %2092 = vmatmul.f32.gmra.mxu0 %v630
        %v2093 = vpop.f32.mrf.mxu0
        %v2094 = vadd.f32 %v1885, %v2093
        %2095 = vmatmul.f32.gmra.mxu0 %v636
        %v2096 = vpop.f32.mrf.mxu0
        %v2097 = vadd.f32 %v1888, %v2096
        %2098 = vmatmul.f32.gmra.mxu0 %v642
        %v2099 = vpop.f32.mrf.mxu0
        %v2100 = vadd.f32 %v1891, %v2099
        %2101 = vmatmul.f32.gmra.mxu0 %v648
        %v2102 = vpop.f32.mrf.mxu0
        %v2103 = vadd.f32 %v1894, %v2102
        %2104 = vmatmul.f32.gmra.mxu0 %v654
        %v2105 = vpop.f32.mrf.mxu0
        %v2106 = vadd.f32 %v1897, %v2105
        %2107 = vmatmul.f32.gmra.mxu0 %v660
        %v2108 = vpop.f32.mrf.mxu0
        %v2109 = vadd.f32 %v1900, %v2108
        %2110 = vmatmul.f32.gmra.mxu0 %v666
        %v2111 = vpop.f32.mrf.mxu0
        %v2112 = vadd.f32 %v1903, %v2111
        %2113 = vmatmul.f32.gmra.mxu0 %v672
        %v2114 = vpop.f32.mrf.mxu0
        %v2115 = vadd.f32 %v1906, %v2114
        %2116 = vmatmul.f32.gmra.mxu0 %v678
        %v2117 = vpop.f32.mrf.mxu0
        %v2118 = vadd.f32 %v1909, %v2117
        %2119 = vmatmul.f32.gmra.mxu0 %v684
        %v2120 = vpop.f32.mrf.mxu0
        %v2121 = vadd.f32 %v1912, %v2120
        %2122 = vmatmul.f32.gmra.mxu0 %v690
        %v2123 = vpop.f32.mrf.mxu0
        %v2124 = vadd.f32 %v1915, %v2123
        %2125 = vmatmul.f32.gmra.mxu0 %v696
        %v2126 = vpop.f32.mrf.mxu0
        %v2127 = vadd.f32 %v1918, %v2126
        %2128 = vmatmul.f32.gmra.mxu0 %v702
        %v2129 = vpop.f32.mrf.mxu0
        %v2130 = vadd.f32 %v1921, %v2129
        %2131 = vmatmul.f32.gmra.mxu0 %v708
        %v2132 = vpop.f32.mrf.mxu0
        %v2133 = vadd.f32 %v1924, %v2132
        %2134 = vmatmul.f32.gmra.mxu0 %v714
        %v2135 = vpop.f32.mrf.mxu0
        %v2136 = vadd.f32 %v1927, %v2135
        %2137 = vmatmul.f32.gmra.mxu0 %v720
        %v2138 = vpop.f32.mrf.mxu0
        %v2139 = vadd.f32 %v1930, %v2138
        %2140 = vmatmul.f32.gmra.mxu0 %v726
        %v2141 = vpop.f32.mrf.mxu0
        %v2142 = vadd.f32 %v1933, %v2141
        %2143 = vmatmul.f32.gmra.mxu0 %v732
        %v2144 = vpop.f32.mrf.mxu0
        %v2145 = vadd.f32 %v1936, %v2144
        %2146 = vmatmul.f32.gmra.mxu0 %v738
        %v2147 = vpop.f32.mrf.mxu0
        %v2148 = vadd.f32 %v1939, %v2147
        %2149 = vmatmul.f32.gmra.mxu0 %v744
        %v2150 = vpop.f32.mrf.mxu0
        %v2151 = vadd.f32 %v1942, %v2150
        %2152 = vmatmul.f32.gmra.mxu0 %v750
        %v2153 = vpop.f32.mrf.mxu0
        %v2154 = vadd.f32 %v1945, %v2153
        %2155 = vmatmul.f32.gmra.mxu0 %v756
        %v2156 = vpop.f32.mrf.mxu0
        %v2157 = vadd.f32 %v1948, %v2156
        %2158 = vmatmul.f32.gmra.mxu0 %v762
        %v2159 = vpop.f32.mrf.mxu0
        %v2160 = vadd.f32 %v1951, %v2159
        %2161 = vmatmul.f32.gmra.mxu0 %v768
        %v2162 = vpop.f32.mrf.mxu0
        %v2163 = vadd.f32 %v1954, %v2162
        %2164 = vmatmul.f32.gmra.mxu0 %v774
        %v2165 = vpop.f32.mrf.mxu0
        %v2166 = vadd.f32 %v1957, %v2165
        %2167 = vmatmul.f32.gmra.mxu0 %v780
        %v2168 = vpop.f32.mrf.mxu0
        %v2169 = vadd.f32 %v1960, %v2168
        %2170 = vmatmul.f32.gmra.mxu0 %v786
        %v2171 = vpop.f32.mrf.mxu0
        %v2172 = vadd.f32 %v1963, %v2171
        %2173 = vmatmul.f32.gmra.mxu0 %v792
        %v2174 = vpop.f32.mrf.mxu0
        %v2175 = vadd.f32 %v1966, %v2174
        %2176 = vmatmul.f32.gmra.mxu0 %v798
        %v2177 = vpop.f32.mrf.mxu0
        %v2178 = vadd.f32 %v1969, %v2177
        %2179 = vmatmul.f32.gmra.mxu0 %v804
        %v2180 = vpop.f32.mrf.mxu0
        %v2181 = vadd.f32 %v1972, %v2180
        %2182 = vmatmul.f32.gmra.mxu0 %v810
        %v2183 = vpop.f32.mrf.mxu0
        %v2184 = vadd.f32 %v1975, %v2183
        %2185 = vmatmul.f32.gmra.mxu0 %v816
        %v2186 = vpop.f32.mrf.mxu0
        %v2187 = vadd.f32 %v1978, %v2186
        %2188 = vmatmul.f32.gmra.mxu0 %v822
        %v2189 = vpop.f32.mrf.mxu0
        %v2190 = vadd.f32 %v1981, %v2189
        %2191 = vmatmul.f32.gmra.mxu0 %v828
        %v2192 = vpop.f32.mrf.mxu0
        %v2193 = vadd.f32 %v1984, %v2192
        %2194 = vmatmul.f32.gmra.mxu0 %v834
        %v2195 = vpop.f32.mrf.mxu0
        %v2196 = vadd.f32 %v1987, %v2195
        %2197 = vmatmul.f32.gmra.mxu0 %v840
        %v2198 = vpop.f32.mrf.mxu0
        %v2199 = vadd.f32 %v1990, %v2198
        %2200 = vmatmul.f32.gmra.mxu0 %v846
        %v2201 = vpop.f32.mrf.mxu0
        %v2202 = vadd.f32 %v1993, %v2201
        %2203 = vmatmul.f32.gmra.mxu0 %v852
        %v2204 = vpop.f32.mrf.mxu0
        %v2205 = vadd.f32 %v1996, %v2204
        %2206 = vdwg.mxu0
        %v2207 = vmax.f32 %v2016, 0.0
        %v2208 = vmax.f32 %v2019, 0.0
        %v2209 = vmax.f32 %v2022, 0.0
        %v2210 = vmax.f32 %v2025, 0.0
        %v2211 = vmax.f32 %v2028, 0.0
        %v2212 = vmax.f32 %v2031, 0.0
        %v2213 = vmax.f32 %v2034, 0.0
        %v2214 = vmax.f32 %v2037, 0.0
        %v2215 = vmax.f32 %v2040, 0.0
        %v2216 = vmax.f32 %v2043, 0.0
        %v2217 = vmax.f32 %v2046, 0.0
        %v2218 = vmax.f32 %v2049, 0.0
        %v2219 = vmax.f32 %v2052, 0.0
        %v2220 = vmax.f32 %v2055, 0.0
        %v2221 = vmax.f32 %v2058, 0.0
        %v2222 = vmax.f32 %v2061, 0.0
        %v2223 = vmax.f32 %v2064, 0.0
        %v2224 = vmax.f32 %v2067, 0.0
        %v2225 = vmax.f32 %v2070, 0.0
        %v2226 = vmax.f32 %v2073, 0.0
        %v2227 = vmax.f32 %v2076, 0.0
        %v2228 = vmax.f32 %v2079, 0.0
        %v2229 = vmax.f32 %v2082, 0.0
        %v2230 = vmax.f32 %v2085, 0.0
        %v2231 = vmax.f32 %v2088, 0.0
        %v2232 = vmax.f32 %v2091, 0.0
        %v2233 = vmax.f32 %v2094, 0.0
        %v2234 = vmax.f32 %v2097, 0.0
        %v2235 = vmax.f32 %v2100, 0.0
        %v2236 = vmax.f32 %v2103, 0.0
        %v2237 = vmax.f32 %v2106, 0.0
        %v2238 = vmax.f32 %v2109, 0.0
        %v2239 = vmax.f32 %v2112, 0.0
        %v2240 = vmax.f32 %v2115, 0.0
        %v2241 = vmax.f32 %v2118, 0.0
        %v2242 = vmax.f32 %v2121, 0.0
        %v2243 = vmax.f32 %v2124, 0.0
        %v2244 = vmax.f32 %v2127, 0.0
        %v2245 = vmax.f32 %v2130, 0.0
        %v2246 = vmax.f32 %v2133, 0.0
        %v2247 = vmax.f32 %v2136, 0.0
        %v2248 = vmax.f32 %v2139, 0.0
        %v2249 = vmax.f32 %v2142, 0.0
        %v2250 = vmax.f32 %v2145, 0.0
        %v2251 = vmax.f32 %v2148, 0.0
        %v2252 = vmax.f32 %v2151, 0.0
        %v2253 = vmax.f32 %v2154, 0.0
        %v2254 = vmax.f32 %v2157, 0.0
        %v2255 = vmax.f32 %v2160, 0.0
        %v2256 = vmax.f32 %v2163, 0.0
        %v2257 = vmax.f32 %v2166, 0.0
        %v2258 = vmax.f32 %v2169, 0.0
        %v2259 = vmax.f32 %v2172, 0.0
        %v2260 = vmax.f32 %v2175, 0.0
        %v2261 = vmax.f32 %v2178, 0.0
        %v2262 = vmax.f32 %v2181, 0.0
        %v2263 = vmax.f32 %v2184, 0.0
        %v2264 = vmax.f32 %v2187, 0.0
        %v2265 = vmax.f32 %v2190, 0.0
        %v2266 = vmax.f32 %v2193, 0.0
        %v2267 = vmax.f32 %v2196, 0.0
        %v2268 = vmax.f32 %v2199, 0.0
        %v2269 = vmax.f32 %v2202, 0.0
        %v2270 = vmax.f32 %v2205, 0.0
        %v2271 = vmin.f32 %v2207, 1.0
        %v2272 = vmin.f32 %v2208, 1.0
        %v2273 = vmin.f32 %v2209, 1.0
        %v2274 = vmin.f32 %v2210, 1.0
        %v2275 = vmin.f32 %v2211, 1.0
        %v2276 = vmin.f32 %v2212, 1.0
        %v2277 = vmin.f32 %v2213, 1.0
        %v2278 = vmin.f32 %v2214, 1.0
        %v2279 = vmin.f32 %v2215, 1.0
        %v2280 = vmin.f32 %v2216, 1.0
        %v2281 = vmin.f32 %v2217, 1.0
        %v2282 = vmin.f32 %v2218, 1.0
        %v2283 = vmin.f32 %v2219, 1.0
        %v2284 = vmin.f32 %v2220, 1.0
        %v2285 = vmin.f32 %v2221, 1.0
        %v2286 = vmin.f32 %v2222, 1.0
        %v2287 = vmin.f32 %v2223, 1.0
        %v2288 = vmin.f32 %v2224, 1.0
        %v2289 = vmin.f32 %v2225, 1.0
        %v2290 = vmin.f32 %v2226, 1.0
        %v2291 = vmin.f32 %v2227, 1.0
        %v2292 = vmin.f32 %v2228, 1.0
        %v2293 = vmin.f32 %v2229, 1.0
        %v2294 = vmin.f32 %v2230, 1.0
        %v2295 = vmin.f32 %v2231, 1.0
        %v2296 = vmin.f32 %v2232, 1.0
        %v2297 = vmin.f32 %v2233, 1.0
        %v2298 = vmin.f32 %v2234, 1.0
        %v2299 = vmin.f32 %v2235, 1.0
        %v2300 = vmin.f32 %v2236, 1.0
        %v2301 = vmin.f32 %v2237, 1.0
        %v2302 = vmin.f32 %v2238, 1.0
        %v2303 = vmin.f32 %v2239, 1.0
        %v2304 = vmin.f32 %v2240, 1.0
        %v2305 = vmin.f32 %v2241, 1.0
        %v2306 = vmin.f32 %v2242, 1.0
        %v2307 = vmin.f32 %v2243, 1.0
        %v2308 = vmin.f32 %v2244, 1.0
        %v2309 = vmin.f32 %v2245, 1.0
        %v2310 = vmin.f32 %v2246, 1.0
        %v2311 = vmin.f32 %v2247, 1.0
        %v2312 = vmin.f32 %v2248, 1.0
        %v2313 = vmin.f32 %v2249, 1.0
        %v2314 = vmin.f32 %v2250, 1.0
        %v2315 = vmin.f32 %v2251, 1.0
        %v2316 = vmin.f32 %v2252, 1.0
        %v2317 = vmin.f32 %v2253, 1.0
        %v2318 = vmin.f32 %v2254, 1.0
        %v2319 = vmin.f32 %v2255, 1.0
        %v2320 = vmin.f32 %v2256, 1.0
        %v2321 = vmin.f32 %v2257, 1.0
        %v2322 = vmin.f32 %v2258, 1.0
        %v2323 = vmin.f32 %v2259, 1.0
        %v2324 = vmin.f32 %v2260, 1.0
        %v2325 = vmin.f32 %v2261, 1.0
        %v2326 = vmin.f32 %v2262, 1.0
        %v2327 = vmin.f32 %v2263, 1.0
        %v2328 = vmin.f32 %v2264, 1.0
        %v2329 = vmin.f32 %v2265, 1.0
        %v2330 = vmin.f32 %v2266, 1.0
        %v2331 = vmin.f32 %v2267, 1.0
        %v2332 = vmin.f32 %v2268, 1.0
        %v2333 = vmin.f32 %v2269, 1.0
        %v2334 = vmin.f32 %v2270, 1.0
        %v2335 = vld [vmem:[#allocation8] sm:$0x1]
        %s2336 = sld [smem:[#allocation2]]
        %v2337 = vstv %s2336
        %vm2338 = vcmask 130048
        %v2340 = vsel %vm2338, %v2335, 0
        %v2343 = vsel %vm2338, %v2271, 0
        %v2346 = vsel %vm2338, %v2272, 0
        %v2349 = vsel %vm2338, %v2273, 0
        %v2352 = vsel %vm2338, %v2274, 0
        %v2355 = vsel %vm2338, %v2275, 0
        %v2358 = vsel %vm2338, %v2276, 0
        %v2361 = vsel %vm2338, %v2277, 0
        %v2364 = vsel %vm2338, %v2278, 0
        %v2367 = vsel %vm2338, %v2279, 0
        %v2370 = vsel %vm2338, %v2280, 0
        %v2373 = vsel %vm2338, %v2281, 0
        %v2376 = vsel %vm2338, %v2282, 0
        %v2379 = vsel %vm2338, %v2283, 0
        %v2382 = vsel %vm2338, %v2284, 0
        %v2385 = vsel %vm2338, %v2285, 0
        %v2388 = vsel %vm2338, %v2286, 0
        %v2391 = vsel %vm2338, %v2287, 0
        %v2394 = vsel %vm2338, %v2288, 0
        %v2397 = vsel %vm2338, %v2289, 0
        %v2400 = vsel %vm2338, %v2290, 0
        %v2403 = vsel %vm2338, %v2291, 0
        %v2406 = vsel %vm2338, %v2292, 0
        %v2409 = vsel %vm2338, %v2293, 0
        %v2412 = vsel %vm2338, %v2294, 0
        %v2415 = vsel %vm2338, %v2295, 0
        %v2418 = vsel %vm2338, %v2296, 0
        %v2421 = vsel %vm2338, %v2297, 0
        %v2424 = vsel %vm2338, %v2298, 0
        %v2427 = vsel %vm2338, %v2299, 0
        %v2430 = vsel %vm2338, %v2300, 0
        %v2433 = vsel %vm2338, %v2301, 0
        %v2436 = vsel %vm2338, %v2302, 0
        %v2439 = vsel %vm2338, %v2303, 0
        %v2442 = vsel %vm2338, %v2304, 0
        %v2445 = vsel %vm2338, %v2305, 0
        %v2448 = vsel %vm2338, %v2306, 0
        %v2451 = vsel %vm2338, %v2307, 0
        %v2454 = vsel %vm2338, %v2308, 0
        %v2457 = vsel %vm2338, %v2309, 0
        %v2460 = vsel %vm2338, %v2310, 0
        %v2463 = vsel %vm2338, %v2311, 0
        %v2466 = vsel %vm2338, %v2312, 0
        %v2469 = vsel %vm2338, %v2313, 0
        %v2472 = vsel %vm2338, %v2314, 0
        %v2475 = vsel %vm2338, %v2315, 0
        %v2478 = vsel %vm2338, %v2316, 0
        %v2481 = vsel %vm2338, %v2317, 0
        %v2484 = vsel %vm2338, %v2318, 0
        %v2487 = vsel %vm2338, %v2319, 0
        %v2490 = vsel %vm2338, %v2320, 0
        %v2493 = vsel %vm2338, %v2321, 0
        %v2496 = vsel %vm2338, %v2322, 0
        %v2499 = vsel %vm2338, %v2323, 0
        %v2502 = vsel %vm2338, %v2324, 0
        %v2505 = vsel %vm2338, %v2325, 0
        %v2508 = vsel %vm2338, %v2326, 0
        %v2511 = vsel %vm2338, %v2327, 0
        %v2514 = vsel %vm2338, %v2328, 0
        %v2517 = vsel %vm2338, %v2329, 0
        %v2520 = vsel %vm2338, %v2330, 0
        %v2523 = vsel %vm2338, %v2331, 0
        %v2526 = vsel %vm2338, %v2332, 0
        %v2529 = vsel %vm2338, %v2333, 0
        %v2532 = vsel %vm2338, %v2334, 0
        %2534 = vmatpush.xpose.msra.mxu0 %v2388
        %2535 = vmatpush.xpose.msra.mxu0 %v2385
        %2536 = vmatpush.xpose.msra.mxu0 %v2382
        %2537 = vmatpush.xpose.msra.mxu0 %v2379
        %2538 = vmatpush.xpose.msra.mxu0 %v2376
        %2539 = vmatpush.xpose.msra.mxu0 %v2373
        %2540 = vmatpush.xpose.msra.mxu0 %v2370
        %2541 = vmatpush.xpose.msra.mxu0 %v2367
        %2542 = vmatpush.xpose.msra.mxu0 %v2364
        %2543 = vmatpush.xpose.msra.mxu0 %v2361
        %2544 = vmatpush.xpose.msra.mxu0 %v2358
        %2545 = vmatpush.xpose.msra.mxu0 %v2355
        %2546 = vmatpush.xpose.msra.mxu0 %v2352
        %2547 = vmatpush.xpose.msra.mxu0 %v2349
        %2548 = vmatpush.xpose.msra.mxu0 %v2346
        %2549 = vmatpush.xpose.msra.mxu0 %v2343
        %2550 = vmatmul.f32.gmra.mxu0 %v2340
        %v2551 = vpop.f32.mrf.mxu0
        %v2552 = vadd.f32 %v2337, %v2551
        %2553 = vdwg.mxu0
        %2554 = vmatpush.xpose.msra.mxu0 %v2436
        %2555 = vmatpush.xpose.msra.mxu0 %v2433
        %2556 = vmatpush.xpose.msra.mxu0 %v2430
        %2557 = vmatpush.xpose.msra.mxu0 %v2427
        %2558 = vmatpush.xpose.msra.mxu0 %v2424
        %2559 = vmatpush.xpose.msra.mxu0 %v2421
        %2560 = vmatpush.xpose.msra.mxu0 %v2418
        %2561 = vmatpush.xpose.msra.mxu0 %v2415
        %2562 = vmatpush.xpose.msra.mxu0 %v2412
        %2563 = vmatpush.xpose.msra.mxu0 %v2409
        %2564 = vmatpush.xpose.msra.mxu0 %v2406
        %2565 = vmatpush.xpose.msra.mxu0 %v2403
        %2566 = vmatpush.xpose.msra.mxu0 %v2400
        %2567 = vmatpush.xpose.msra.mxu0 %v2397
        %2568 = vmatpush.xpose.msra.mxu0 %v2394
        %2569 = vmatpush.xpose.msra.mxu0 %v2391
        %2570 = vmatmul.f32.gmra.mxu0 %v2340
        %v2571 = vpop.f32.mrf.mxu0
        %v2572 = vadd.f32 %v2337, %v2571
        %2573 = vdwg.mxu0
        %2574 = vmatpush.xpose.msra.mxu0 %v2484
        %2575 = vmatpush.xpose.msra.mxu0 %v2481
        %2576 = vmatpush.xpose.msra.mxu0 %v2478
        %2577 = vmatpush.xpose.msra.mxu0 %v2475
        %2578 = vmatpush.xpose.msra.mxu0 %v2472
        %2579 = vmatpush.xpose.msra.mxu0 %v2469
        %2580 = vmatpush.xpose.msra.mxu0 %v2466
        %2581 = vmatpush.xpose.msra.mxu0 %v2463
        %2582 = vmatpush.xpose.msra.mxu0 %v2460
        %2583 = vmatpush.xpose.msra.mxu0 %v2457
        %2584 = vmatpush.xpose.msra.mxu0 %v2454
        %2585 = vmatpush.xpose.msra.mxu0 %v2451
        %2586 = vmatpush.xpose.msra.mxu0 %v2448
        %2587 = vmatpush.xpose.msra.mxu0 %v2445
        %2588 = vmatpush.xpose.msra.mxu0 %v2442
        %2589 = vmatpush.xpose.msra.mxu0 %v2439
        %2590 = vmatmul.f32.gmra.mxu0 %v2340
        %v2591 = vpop.f32.mrf.mxu0
        %v2592 = vadd.f32 %v2337, %v2591
        %2593 = vdwg.mxu0
        %2594 = vmatpush.xpose.msra.mxu0 %v2532
        %2595 = vmatpush.xpose.msra.mxu0 %v2529
        %2596 = vmatpush.xpose.msra.mxu0 %v2526
        %2597 = vmatpush.xpose.msra.mxu0 %v2523
        %2598 = vmatpush.xpose.msra.mxu0 %v2520
        %2599 = vmatpush.xpose.msra.mxu0 %v2517
        %2600 = vmatpush.xpose.msra.mxu0 %v2514
        %2601 = vmatpush.xpose.msra.mxu0 %v2511
        %2602 = vmatpush.xpose.msra.mxu0 %v2508
        %2603 = vmatpush.xpose.msra.mxu0 %v2505
        %2604 = vmatpush.xpose.msra.mxu0 %v2502
        %2605 = vmatpush.xpose.msra.mxu0 %v2499
        %2606 = vmatpush.xpose.msra.mxu0 %v2496
        %2607 = vmatpush.xpose.msra.mxu0 %v2493
        %2608 = vmatpush.xpose.msra.mxu0 %v2490
        %2609 = vmatpush.xpose.msra.mxu0 %v2487
        %2610 = vmatmul.f32.gmra.mxu0 %v2340
        %v2611 = vpop.f32.mrf.mxu0
        %v2612 = vadd.f32 %v2337, %v2611
        %2613 = vdwg.mxu0
        %v2614 = vxor.u32 %v2552, 2147483648
        %v2615 = vxor.u32 %v2572, 2147483648
        %v2616 = vxor.u32 %v2592, 2147483648
        %v2617 = vxor.u32 %v2612, 2147483648
        %v2618 = vmul.f32 %v2614, 1.442695
        %v2619 = vpow.pop %v2618
        %v2620 = vmul.f32 %v2615, 1.442695
        %v2621 = vpow.pop %v2620
        %v2622 = vmul.f32 %v2616, 1.442695
        %v2623 = vpow.pop %v2622
        %v2624 = vmul.f32 %v2617, 1.442695
        %v2625 = vpow.pop %v2624
        %v2626 = vadd.f32 %v2619, 1.0
        %v2627 = vadd.f32 %v2621, 1.0
        %v2628 = vadd.f32 %v2623, 1.0
        %v2629 = vadd.f32 %v2625, 1.0
        %v2630 = vrcp.pop %v2626
        %v2631 = vmul.f32 %v2626, %v2630
        %v2632 = vsub.f32 1.0, %v2631
        %v2633 = vmul.f32 %v2630, %v2632
        %v2634 = vadd.f32 %v2630, %v2633
        %vm2635 = vweird.f32 %v2626
        %vm2636 = vweird.f32 %v2630
        %vm2637 = vmor %vm2635, %vm2636
        %v2638 = vsel %vm2637, %v2630, %v2634
        %v2639 = vand.u32 2147483647, %v2626
        %vm2640 = vcmp.eq.f32.partialorder %v2639, 8.507059e+37
        %v2641 = vand.u32 %v2626, 2147483648
        %v2642 = vor.u32 1.1754944e-38, %v2641
        %v2643 = vsel %vm2640, %v2642, %v2638
        %v2644 = vmul.f32 1.0, %v2643
        %v2645 = vrcp.pop %v2627
        %v2646 = vmul.f32 %v2627, %v2645
        %v2647 = vsub.f32 1.0, %v2646
        %v2648 = vmul.f32 %v2645, %v2647
        %v2649 = vadd.f32 %v2645, %v2648
        %vm2650 = vweird.f32 %v2627
        %vm2651 = vweird.f32 %v2645
        %vm2652 = vmor %vm2650, %vm2651
        %v2653 = vsel %vm2652, %v2645, %v2649
        %v2654 = vand.u32 2147483647, %v2627
        %vm2655 = vcmp.eq.f32.partialorder %v2654, 8.507059e+37
        %v2656 = vand.u32 %v2627, 2147483648
        %v2657 = vor.u32 1.1754944e-38, %v2656
        %v2658 = vsel %vm2655, %v2657, %v2653
        %v2659 = vmul.f32 1.0, %v2658
        %v2660 = vrcp.pop %v2628
        %v2661 = vmul.f32 %v2628, %v2660
        %v2662 = vsub.f32 1.0, %v2661
        %v2663 = vmul.f32 %v2660, %v2662
        %v2664 = vadd.f32 %v2660, %v2663
        %vm2665 = vweird.f32 %v2628
        %vm2666 = vweird.f32 %v2660
        %vm2667 = vmor %vm2665, %vm2666
        %v2668 = vsel %vm2667, %v2660, %v2664
        %v2669 = vand.u32 2147483647, %v2628
        %vm2670 = vcmp.eq.f32.partialorder %v2669, 8.507059e+37
        %v2671 = vand.u32 %v2628, 2147483648
        %v2672 = vor.u32 1.1754944e-38, %v2671
        %v2673 = vsel %vm2670, %v2672, %v2668
        %v2674 = vmul.f32 1.0, %v2673
        %v2675 = vrcp.pop %v2629
        %v2676 = vmul.f32 %v2629, %v2675
        %v2677 = vsub.f32 1.0, %v2676
        %v2678 = vmul.f32 %v2675, %v2677
        %v2679 = vadd.f32 %v2675, %v2678
        %vm2680 = vweird.f32 %v2629
        %vm2681 = vweird.f32 %v2675
        %vm2682 = vmor %vm2680, %vm2681
        %v2683 = vsel %vm2682, %v2675, %v2679
        %v2684 = vand.u32 2147483647, %v2629
        %vm2685 = vcmp.eq.f32.partialorder %v2684, 8.507059e+37
        %v2686 = vand.u32 %v2629, 2147483648
        %v2687 = vor.u32 1.1754944e-38, %v2686
        %v2688 = vsel %vm2685, %v2687, %v2683
        %v2689 = vmul.f32 1.0, %v2688
        %v2694 = vrot.slane %v2659, 7
        %v2695 = vrot.slane %v2674, 6
        %v2696 = vrot.slane %v2689, 5
        %vm2697 = vcmask 1040384
        %v2698 = vsel %vm2697, %v2644, %v2694
        %vm2699 = vcmask 1042434
        %v2700 = vsel %vm2699, %v2695, %v2696
        %vm2701 = vcmask 1041408
        %v2702 = vsel %vm2701, %v2698, %v2700
        %v2704 = vlaneseq
        %vm2705 = vcmp.ge.s32.totalorder %v2704, 0
        %vm2706 = vcmp.lt.s32.totalorder %v2704, 512
        %vm2707 = vmand %vm2705, %vm2706
        %2708 = vst.msk [vmem:[%s275] sm:$0xf] %vm2707, %v2702
        %s2709 = sand.u32 %s142, 1
        %s2710 = scalar_lea.sflag [#allocation5], %s2709
        %s2711 = sand.u32 %s142, 1
        %s2712 = smul.addr %s2711, 4
        %s2713 = scalar_lea.vmem [#allocation9], %s2712
        // Predicated region
        $region53: #{tpu_custom_call.1} parent=39 // pred_check
          %p2714 = pneg %p152
        $region54: #{tpu_custom_call.1} parent=39 // pred_check_branch
          %2716 = sbr.rel (%p2714) target = $region56
        $region55: #{tpu_custom_call.1} parent=39 // pred_region
          %2718 = vsyncadd %s2710, 0
          %s2719 = smul.addr %s24, 4
          %s2720 = scalar_lea.hbm %s5, %s2719
          %s2722 = sshll.u32 %s2713, 4
          %s2723 = int_to_ptr.vmem [resolvable:$true] %s2722
          %s2724 = sshll.u32 %s2720, 4
          %s2725 = int_to_ptr.hbm [resolvable:$true] %s2724
          %2727 = dma.vmem_to_hbm [thread:$0]  %s2723, 64, %s2725, %s2710
        $region56: #{tpu_custom_call.1} parent=39 // pred_fallthru
          _
      $region40: #{tpu_custom_call.1} parent=5 // pred_fallthru
        _
      %p2728 = scmp.le.s32.totalorder 2, %s19
      // Predicated region
      $region57: #{tpu_custom_call.1} parent=5 // pred_check
        %p2729 = pneg %p2728
      $region58: #{tpu_custom_call.1} parent=5 // pred_check_branch
        %2731 = sbr.rel (%p2729) target = $region60
      $region59: #{tpu_custom_call.1} parent=5 // pred_region
        %s2732 = ssub.s32 %s19, 2
        // Predicated region
        $region61: #{tpu_custom_call.1} parent=59 // pred_check
          %p2733 = pneg %p158
        $region62: #{tpu_custom_call.1} parent=59 // pred_check_branch
          %2735 = sbr.rel (%p2733) target = $region64
        $region63: #{tpu_custom_call.1} parent=59 // pred_region
          %s2736 = sand.u32 %s143, 1
          %s2737 = scalar_lea.sflag [#allocation5], %s2736
          %s2738 = sand.u32 %s143, 1
          %s2739 = smul.addr %s2738, 4
          %s2740 = scalar_lea.vmem [#allocation9], %s2739
          %2742 = dma.done %s2737, 64
        $region64: #{tpu_custom_call.1} parent=59 // pred_fallthru
          _
      $region60: #{tpu_custom_call.1} parent=5 // pred_fallthru
        _
    $region6: #{tpu_custom_call.1} parent=1 // loop_footer
      %s23 = sadd.s32 1, %s19
    $region7: #{tpu_custom_call.1} parent=1 // loop_footer_branch
      %18 = sbr.rel target = $region3
    $region8: #{tpu_custom_call.1} parent=1 // loop_exit
      _
    %2743 = vsyncpa [#allocation4], 1
    %s2744 = scalar_lea.sflag [#allocation4], 1
    %2745 = vsyncpa %s2744, 1
    %2746 = vsyncpa [#allocation7], 1
    %2747 = vsyncpa [#allocation5], 1
    %s2748 = scalar_lea.sflag [#allocation5], 1
    %2749 = vsyncpa %s2748, 1

</llo_original>
